<compile_context>
chip_gen: v5e
topology: v5e:2x2
jax: 0.10.0
libtpu: 0.0.40
codegen_flags: <defaults>
</compile_context>

<pallas_src>
import jax
import jax.numpy as jnp
from jax import lax
from jax.experimental import pallas as pl
from jax.experimental.pallas import tpu as pltpu


def _lstm_classifier_kernel(x_ref, wih0_ref, whh0_ref, b0_ref,
                            w1_ref, b1_ref, wout_ref, bout_ref,
                            out_ref,
                            h0_s, c0_s, h1_s, c1_s):
    """One time-block of the 2-layer LSTM recurrence (+ final Linear on last block).

    x_ref:   (Tt, B, D) bf16 block of the (T, B, D) input.
    wih0:    (D, 4H) bf16, whh0: (H, 4H) bf16, b0: (1, 4H) f32 (bih0 + bhh0).
    w1:      (2H, 4H) bf16 = [Wih1; Whh1] stacked, b1: (1, 4H) f32.
    wout:    (H, O) bf16, bout: (1, O) f32.
    out_ref: (B, O) f32, written only on the last grid step.
    h*_s/c*_s: (B, H) f32 scratch carrying state across time blocks.
    """
    Tt, B, D = x_ref.shape
    H = whh0_ref.shape[0]

    t_blk = pl.program_id(0)

    @pl.when(t_blk == 0)
    def _init_state():
        h0_s[...] = jnp.zeros_like(h0_s)
        c0_s[...] = jnp.zeros_like(c0_s)
        h1_s[...] = jnp.zeros_like(h1_s)
        c1_s[...] = jnp.zeros_like(c1_s)

    # --- Batched layer-0 input projection for the whole time block (one MXU pass),
    #     with the layer-0 bias folded in.
    x_blk = x_ref[...].reshape(Tt * B, D)                               # bf16
    xproj = (jnp.dot(x_blk, wih0_ref[...],
                     preferred_element_type=jnp.float32)
             .reshape(Tt, B, 4 * H)
             + b0_ref[...])                                             # f32 (Tt,B,4H)

    whh0 = whh0_ref[...]                                                # bf16 (H, 4H)
    w1 = w1_ref[...]                                                    # bf16 (2H, 4H)
    b1b = jnp.broadcast_to(b1_ref[...], (B, 4 * H))                     # hoisted bcast

    # --- State carried in vregs for the duration of this block.
    h0 = h0_s[...]
    c0 = c0_s[...]
    h1 = h1_s[...]
    c1 = c1_s[...]

    def split_gates(g):
        i = jax.nn.sigmoid(g[:, 0 * H:1 * H])
        f = jax.nn.sigmoid(g[:, 1 * H:2 * H])
        gg = jnp.tanh(g[:, 2 * H:3 * H])
        o = jax.nn.sigmoid(g[:, 3 * H:4 * H])
        return i, f, gg, o

    # Fully unrolled time loop (Tt is a small static trip count).
    for t in range(Tt):
        # Layer 0: only the recurrent matmul is on the serial path.
        g0 = xproj[t] + jnp.dot(h0.astype(jnp.bfloat16), whh0,
                                preferred_element_type=jnp.float32)
        i0, f0, gg0, o0 = split_gates(g0)
        c0 = f0 * c0 + i0 * gg0
        h0 = o0 * jnp.tanh(c0)

        # Layer 1: single fused matmul [h0_t ; h1_{t-1}] @ [Wih1; Whh1].
        hcat = jnp.concatenate([h0, h1], axis=1).astype(jnp.bfloat16)   # (B, 2H)
        g1 = jnp.dot(hcat, w1, preferred_element_type=jnp.float32) + b1b
        i1, f1, gg1, o1 = split_gates(g1)
        c1 = f1 * c1 + i1 * gg1
        h1 = o1 * jnp.tanh(c1)

    # Carry state to the next time block.
    h0_s[...] = h0
    c0_s[...] = c0
    h1_s[...] = h1
    c1_s[...] = c1

    # Linear head on lstm_out[:, -1] (== final h of layer 1), last block only.
    @pl.when(t_blk == pl.num_programs(0) - 1)
    def _finalize():
        out_ref[...] = (jnp.dot(h1.astype(jnp.bfloat16), wout_ref[...],
                                preferred_element_type=jnp.float32)
                        + bout_ref[...])


def multilabel_lstm_classifier(x_btd, params, *, time_block=None):
    """x_btd: (B, T, D) float32 -> logits (B, output_dim) float32."""
    B, T, D = x_btd.shape
    H = params["whh0_t"].shape[0]
    O = params["wout_t"].shape[1]

    if time_block is None:
        time_block = T
    assert T % time_block == 0, "T must be divisible by time_block"
    n_blocks = T // time_block

    # (T, B, D) layout so the grid streams over time; bf16 for the MXU.
    x_tbd = jnp.transpose(x_btd, (1, 0, 2)).astype(jnp.bfloat16)

    wih0 = params["wih0_t"].astype(jnp.bfloat16)                        # (D, 4H)
    whh0 = params["whh0_t"].astype(jnp.bfloat16)                        # (H, 4H)
    w1 = jnp.concatenate([params["wih1_t"], params["whh1_t"]],
                         axis=0).astype(jnp.bfloat16)                   # (2H, 4H)
    wout = params["wout_t"].astype(jnp.bfloat16)                        # (H, O)
    b0, b1, bout = params["b0"], params["b1"], params["bout"]           # f32

    def resident2d(arr):
        # Full-array block, constant block index -> stays resident in VMEM.
        return pl.BlockSpec(arr.shape, lambda t: (0, 0))

    return pl.pallas_call(
        _lstm_classifier_kernel,
        out_shape=jax.ShapeDtypeStruct((B, O), jnp.float32),
        grid=(n_blocks,),
        in_specs=[
            pl.BlockSpec((time_block, B, D), lambda t: (t, 0, 0)),      # streamed x
            resident2d(wih0), resident2d(whh0), resident2d(b0),
            resident2d(w1), resident2d(b1),
            resident2d(wout), resident2d(bout),
        ],
        out_specs=pl.BlockSpec((B, O), lambda t: (0, 0)),
        scratch_shapes=[pltpu.VMEM((B, H), jnp.float32)] * 4,
        compiler_params=pltpu.CompilerParams(
            dimension_semantics=("arbitrary",)),                        # serial recurrence
    )(x_tbd, wih0, whh0, b0, w1, b1, wout, bout)


def init_params(key, input_dim, hidden_dim, output_dim):
    """Deterministic synthetic params, mimicking PyTorch default U(-1/sqrt(H), 1/sqrt(H))."""
    bound = 1.0 / float(hidden_dim) ** 0.5
    keys = jax.random.split(key, 10)

    def u(kk, shape):
        return jax.random.uniform(kk, shape, jnp.float32, -bound, bound)

    wih0 = u(keys[0], (4 * hidden_dim, input_dim))
    whh0 = u(keys[1], (4 * hidden_dim, hidden_dim))
    bih0 = u(keys[2], (4 * hidden_dim,))
    bhh0 = u(keys[3], (4 * hidden_dim,))
    wih1 = u(keys[4], (4 * hidden_dim, hidden_dim))
    whh1 = u(keys[5], (4 * hidden_dim, hidden_dim))
    bih1 = u(keys[6], (4 * hidden_dim,))
    bhh1 = u(keys[7], (4 * hidden_dim,))
    wout = u(keys[8], (output_dim, hidden_dim))
    bout = u(keys[9], (output_dim,))

    return dict(
        wih0_t=wih0.T, whh0_t=whh0.T, b0=(bih0 + bhh0)[None, :],
        wih1_t=wih1.T, whh1_t=whh1.T, b1=(bih1 + bhh1)[None, :],
        wout_t=wout.T, bout=bout[None, :],
    )


def reference_forward(x_btd, params):
    """Pure-JAX f32 reference (same math, lax.scan over time) for correctness check."""
    H = params["whh0_t"].shape[0]

    def cell(x_in, h, c, wih, whh, b):
        gates = x_in @ wih + h @ whh + b
        i = jax.nn.sigmoid(gates[:, 0 * H:1 * H])
        f = jax.nn.sigmoid(gates[:, 1 * H:2 * H])
        g = jnp.tanh(gates[:, 2 * H:3 * H])
        o = jax.nn.sigmoid(gates[:, 3 * H:4 * H])
        c_new = f * c + i * g
        return o * jnp.tanh(c_new), c_new

    B = x_btd.shape[0]
    x_tbd = jnp.transpose(x_btd, (1, 0, 2))
    init = (jnp.zeros((B, H)), jnp.zeros((B, H)),
            jnp.zeros((B, H)), jnp.zeros((B, H)))

    def step(carry, x_t):
        h0, c0, h1, c1 = carry
        h0, c0 = cell(x_t, h0, c0, params["wih0_t"], params["whh0_t"], params["b0"])
        h1, c1 = cell(h0, h1, c1, params["wih1_t"], params["whh1_t"], params["b1"])
        return (h0, c0, h1, c1), None

    (h0, c0, h1, c1), _ = lax.scan(step, init, x_tbd)
    return h1 @ params["wout_t"] + params["bout"]


if __name__ == "__main__":
    B, T, D, H, O = 2, 8, 16, 32, 5   # batch, seq, input_dim, hidden_dim, output_dim

    root = jax.random.PRNGKey(0)
    k_x, k_p = jax.random.split(root)
    x = jax.random.normal(k_x, (B, T, D), dtype=jnp.float32)
    params = init_params(k_p, D, H, O)

    # time_block=4 exercises the time-gridded streaming path (grid=(2,)).
    logits = multilabel_lstm_classifier(x, params, time_block=4)
    logits = jax.block_until_ready(logits)

    ref = jax.block_until_ready(reference_forward(x, params))
    assert logits.shape == (B, O)
    # bf16 MXU inputs (f32 accumulate/state) -> loosened tolerance vs f32 reference.
    assert jnp.allclose(logits, ref, rtol=5e-2, atol=5e-2), "kernel/reference mismatch"

    print("KERNEL_OK")
</pallas_src>

<mosaic_0001>
module attributes {stable_mosaic.version = 11 : i64} {
  func.func @_lstm_classifier_kernel(%arg0: i32, %arg1: memref<4x2x16xbf16, #tpu.memory_space<vmem>>, %arg2: memref<16x128xbf16, #tpu.memory_space<vmem>>, %arg3: memref<32x128xbf16, #tpu.memory_space<vmem>>, %arg4: memref<1x128xf32, #tpu.memory_space<vmem>>, %arg5: memref<64x128xbf16, #tpu.memory_space<vmem>>, %arg6: memref<1x128xf32, #tpu.memory_space<vmem>>, %arg7: memref<32x5xbf16, #tpu.memory_space<vmem>>, %arg8: memref<1x5xf32, #tpu.memory_space<vmem>>, %arg9: memref<2x5xf32, #tpu.memory_space<vmem>>, %arg10: memref<2x32xf32, #tpu.memory_space<vmem>>, %arg11: memref<2x32xf32, #tpu.memory_space<vmem>>, %arg12: memref<2x32xf32, #tpu.memory_space<vmem>>, %arg13: memref<2x32xf32, #tpu.memory_space<vmem>>) attributes {dimension_semantics = [#tpu.dimension_semantics<arbitrary>], iteration_bounds = array<i64: 2>, scalar_prefetch = 0 : i64, scratch_operands = 4 : i64, tpu.core_type = #tpu.core_type<tc>, window_params = [{transform_indices = @transform_0, window_bounds = array<i64: 4, 2, 16>}, {pipeline_mode = #tpu.pipeline_mode<synchronous>, transform_indices = @transform_1, window_bounds = array<i64: 16, 128>}, {pipeline_mode = #tpu.pipeline_mode<synchronous>, transform_indices = @transform_2, window_bounds = array<i64: 32, 128>}, {pipeline_mode = #tpu.pipeline_mode<synchronous>, transform_indices = @transform_3, window_bounds = array<i64: 1, 128>}, {pipeline_mode = #tpu.pipeline_mode<synchronous>, transform_indices = @transform_4, window_bounds = array<i64: 64, 128>}, {pipeline_mode = #tpu.pipeline_mode<synchronous>, transform_indices = @transform_5, window_bounds = array<i64: 1, 128>}, {pipeline_mode = #tpu.pipeline_mode<synchronous>, transform_indices = @transform_6, window_bounds = array<i64: 32, 5>}, {pipeline_mode = #tpu.pipeline_mode<synchronous>, transform_indices = @transform_7, window_bounds = array<i64: 1, 5>}, {pipeline_mode = #tpu.pipeline_mode<synchronous>, transform_indices = @transform_8, window_bounds = array<i64: 2, 5>}]} {
    %c0_i32 = arith.constant 0 : i32
    %0 = arith.cmpi eq, %arg0, %c0_i32 : i32
    %1 = arith.extui %0 : i1 to i32
    %c0_i32_0 = arith.constant 0 : i32
    %2 = arith.cmpi ne, %1, %c0_i32_0 : i32
    scf.if %2 {
      %cst_62 = arith.constant 0.000000e+00 : f32
      %264 = vector.broadcast %cst_62 : f32 to vector<2x32xf32>
      %c0_63 = arith.constant 0 : index
      %c0_64 = arith.constant 0 : index
      %265 = vector.load %arg10[%c0_63, %c0_64] : memref<2x32xf32, #tpu.memory_space<vmem>>, vector<2x32xf32>
      tpu.vector_store %arg10[%c0_63, %c0_64], %264 {strides = array<i32>} : memref<2x32xf32, #tpu.memory_space<vmem>>, vector<2x32xf32>,
      %cst_65 = arith.constant 0.000000e+00 : f32
      %266 = vector.broadcast %cst_65 : f32 to vector<2x32xf32>
      %c0_66 = arith.constant 0 : index
      %c0_67 = arith.constant 0 : index
      %267 = vector.load %arg11[%c0_66, %c0_67] : memref<2x32xf32, #tpu.memory_space<vmem>>, vector<2x32xf32>
      tpu.vector_store %arg11[%c0_66, %c0_67], %266 {strides = array<i32>} : memref<2x32xf32, #tpu.memory_space<vmem>>, vector<2x32xf32>,
      %cst_68 = arith.constant 0.000000e+00 : f32
      %268 = vector.broadcast %cst_68 : f32 to vector<2x32xf32>
      %c0_69 = arith.constant 0 : index
      %c0_70 = arith.constant 0 : index
      %269 = vector.load %arg12[%c0_69, %c0_70] : memref<2x32xf32, #tpu.memory_space<vmem>>, vector<2x32xf32>
      tpu.vector_store %arg12[%c0_69, %c0_70], %268 {strides = array<i32>} : memref<2x32xf32, #tpu.memory_space<vmem>>, vector<2x32xf32>,
      %cst_71 = arith.constant 0.000000e+00 : f32
      %270 = vector.broadcast %cst_71 : f32 to vector<2x32xf32>
      %c0_72 = arith.constant 0 : index
      %c0_73 = arith.constant 0 : index
      %271 = vector.load %arg13[%c0_72, %c0_73] : memref<2x32xf32, #tpu.memory_space<vmem>>, vector<2x32xf32>
      tpu.vector_store %arg13[%c0_72, %c0_73], %270 {strides = array<i32>} : memref<2x32xf32, #tpu.memory_space<vmem>>, vector<2x32xf32>,
    } else {
    }
    %c0 = arith.constant 0 : index
    %c0_1 = arith.constant 0 : index
    %c0_2 = arith.constant 0 : index
    %3 = vector.load %arg1[%c0, %c0_1, %c0_2] : memref<4x2x16xbf16, #tpu.memory_space<vmem>>, vector<4x2x16xbf16>
    %4 = vector.shape_cast %3 : vector<4x2x16xbf16> to vector<8x16xbf16>
    %c0_3 = arith.constant 0 : index
    %c0_4 = arith.constant 0 : index
    %5 = vector.load %arg2[%c0_3, %c0_4] : memref<16x128xbf16, #tpu.memory_space<vmem>>, vector<16x128xbf16>
    %cst = arith.constant dense<0.000000e+00> : vector<8x128xf32>
    %6 = tpu.matmul %4, %5, %cst {dimension_numbers = #tpu.dot_dimension_numbers<[1], [0], [0], [1], [0, 0, 1, 1], [], []>} : vector<8x16xbf16>, vector<16x128xbf16>, vector<8x128xf32> -> vector<8x128xf32>
    %7 = vector.shape_cast %6 : vector<8x128xf32> to vector<4x2x128xf32>
    %c0_5 = arith.constant 0 : index
    %c0_6 = arith.constant 0 : index
    %8 = vector.load %arg4[%c0_5, %c0_6] : memref<1x128xf32, #tpu.memory_space<vmem>>, vector<1x128xf32>
    %9 = vector.shape_cast %8 : vector<1x128xf32> to vector<1x1x128xf32>
    %10 = vector.broadcast %9 : vector<1x1x128xf32> to vector<4x2x128xf32>
    %11 = arith.addf %7, %10 : vector<4x2x128xf32>
    %c0_7 = arith.constant 0 : index
    %c0_8 = arith.constant 0 : index
    %12 = vector.load %arg3[%c0_7, %c0_8] : memref<32x128xbf16, #tpu.memory_space<vmem>>, vector<32x128xbf16>
    %c0_9 = arith.constant 0 : index
    %c0_10 = arith.constant 0 : index
    %13 = vector.load %arg5[%c0_9, %c0_10] : memref<64x128xbf16, #tpu.memory_space<vmem>>, vector<64x128xbf16>
    %c0_11 = arith.constant 0 : index
    %c0_12 = arith.constant 0 : index
    %14 = vector.load %arg6[%c0_11, %c0_12] : memref<1x128xf32, #tpu.memory_space<vmem>>, vector<1x128xf32>
    %15 = vector.shape_cast %14 : vector<1x128xf32> to vector<1x128xf32>
    %16 = vector.broadcast %15 : vector<1x128xf32> to vector<2x128xf32>
    %c0_13 = arith.constant 0 : index
    %c0_14 = arith.constant 0 : index
    %17 = vector.load %arg10[%c0_13, %c0_14] : memref<2x32xf32, #tpu.memory_space<vmem>>, vector<2x32xf32>
    %c0_15 = arith.constant 0 : index
    %c0_16 = arith.constant 0 : index
    %18 = vector.load %arg11[%c0_15, %c0_16] : memref<2x32xf32, #tpu.memory_space<vmem>>, vector<2x32xf32>
    %c0_17 = arith.constant 0 : index
    %c0_18 = arith.constant 0 : index
    %19 = vector.load %arg12[%c0_17, %c0_18] : memref<2x32xf32, #tpu.memory_space<vmem>>, vector<2x32xf32>
    %c0_19 = arith.constant 0 : index
    %c0_20 = arith.constant 0 : index
    %20 = vector.load %arg13[%c0_19, %c0_20] : memref<2x32xf32, #tpu.memory_space<vmem>>, vector<2x32xf32>
    %21 = vector.extract_strided_slice %11 {offsets = [0, 0, 0], sizes = [1, 2, 128], strides = [1, 1, 1]} : vector<4x2x128xf32> to vector<1x2x128xf32>
    %22 = vector.shape_cast %21 : vector<1x2x128xf32> to vector<2x128xf32>
    %23 = arith.truncf %17 : vector<2x32xf32> to vector<2x32xbf16>
    %cst_21 = arith.constant dense<0.000000e+00> : vector<2x128xf32>
    %24 = tpu.matmul %23, %12, %cst_21 {dimension_numbers = #tpu.dot_dimension_numbers<[1], [0], [0], [1], [0, 0, 1, 1], [], []>} : vector<2x32xbf16>, vector<32x128xbf16>, vector<2x128xf32> -> vector<2x128xf32>
    %25 = arith.addf %22, %24 : vector<2x128xf32>
    %26 = vector.extract_strided_slice %25 {offsets = [0, 0], sizes = [2, 32], strides = [1, 1]} : vector<2x128xf32> to vector<2x32xf32>
    %27 = arith.negf %26 : vector<2x32xf32>
    %28 = math.exp %27 : vector<2x32xf32>
    %cst_22 = arith.constant 1.000000e+00 : f32
    %29 = vector.broadcast %cst_22 : f32 to vector<2x32xf32>
    %30 = arith.addf %29, %28 : vector<2x32xf32>
    %31 = arith.divf %29, %30 : vector<2x32xf32>
    %32 = vector.extract_strided_slice %25 {offsets = [0, 32], sizes = [2, 32], strides = [1, 1]} : vector<2x128xf32> to vector<2x32xf32>
    %33 = arith.negf %32 : vector<2x32xf32>
    %34 = math.exp %33 : vector<2x32xf32>
    %cst_23 = arith.constant 1.000000e+00 : f32
    %35 = vector.broadcast %cst_23 : f32 to vector<2x32xf32>
    %36 = arith.addf %35, %34 : vector<2x32xf32>
    %37 = arith.divf %35, %36 : vector<2x32xf32>
    %38 = vector.extract_strided_slice %25 {offsets = [0, 64], sizes = [2, 32], strides = [1, 1]} : vector<2x128xf32> to vector<2x32xf32>
    %39 = math.tanh %38 : vector<2x32xf32>
    %40 = vector.extract_strided_slice %25 {offsets = [0, 96], sizes = [2, 32], strides = [1, 1]} : vector<2x128xf32> to vector<2x32xf32>
    %41 = arith.negf %40 : vector<2x32xf32>
    %42 = math.exp %41 : vector<2x32xf32>
    %cst_24 = arith.constant 1.000000e+00 : f32
    %43 = vector.broadcast %cst_24 : f32 to vector<2x32xf32>
    %44 = arith.addf %43, %42 : vector<2x32xf32>
    %45 = arith.divf %43, %44 : vector<2x32xf32>
    %46 = arith.mulf %37, %18 : vector<2x32xf32>
    %47 = arith.mulf %31, %39 : vector<2x32xf32>
    %48 = arith.addf %46, %47 : vector<2x32xf32>
    %49 = math.tanh %48 : vector<2x32xf32>
    %50 = arith.mulf %45, %49 : vector<2x32xf32>
    %51 = tpu.concatenate %50, %19 in 1 : vector<2x32xf32>, vector<2x32xf32> -> vector<2x64xf32>
    %52 = arith.truncf %51 : vector<2x64xf32> to vector<2x64xbf16>
    %cst_25 = arith.constant dense<0.000000e+00> : vector<2x128xf32>
    %53 = tpu.matmul %52, %13, %cst_25 {dimension_numbers = #tpu.dot_dimension_numbers<[1], [0], [0], [1], [0, 0, 1, 1], [], []>} : vector<2x64xbf16>, vector<64x128xbf16>, vector<2x128xf32> -> vector<2x128xf32>
    %54 = arith.addf %53, %16 : vector<2x128xf32>
    %55 = vector.extract_strided_slice %54 {offsets = [0, 0], sizes = [2, 32], strides = [1, 1]} : vector<2x128xf32> to vector<2x32xf32>
    %56 = arith.negf %55 : vector<2x32xf32>
    %57 = math.exp %56 : vector<2x32xf32>
    %cst_26 = arith.constant 1.000000e+00 : f32
    %58 = vector.broadcast %cst_26 : f32 to vector<2x32xf32>
    %59 = arith.addf %58, %57 : vector<2x32xf32>
    %60 = arith.divf %58, %59 : vector<2x32xf32>
    %61 = vector.extract_strided_slice %54 {offsets = [0, 32], sizes = [2, 32], strides = [1, 1]} : vector<2x128xf32> to vector<2x32xf32>
    %62 = arith.negf %61 : vector<2x32xf32>
    %63 = math.exp %62 : vector<2x32xf32>
    %cst_27 = arith.constant 1.000000e+00 : f32
    %64 = vector.broadcast %cst_27 : f32 to vector<2x32xf32>
    %65 = arith.addf %64, %63 : vector<2x32xf32>
    %66 = arith.divf %64, %65 : vector<2x32xf32>
    %67 = vector.extract_strided_slice %54 {offsets = [0, 64], sizes = [2, 32], strides = [1, 1]} : vector<2x128xf32> to vector<2x32xf32>
    %68 = math.tanh %67 : vector<2x32xf32>
    %69 = vector.extract_strided_slice %54 {offsets = [0, 96], sizes = [2, 32], strides = [1, 1]} : vector<2x128xf32> to vector<2x32xf32>
    %70 = arith.negf %69 : vector<2x32xf32>
    %71 = math.exp %70 : vector<2x32xf32>
    %cst_28 = arith.constant 1.000000e+00 : f32
    %72 = vector.broadcast %cst_28 : f32 to vector<2x32xf32>
    %73 = arith.addf %72, %71 : vector<2x32xf32>
    %74 = arith.divf %72, %73 : vector<2x32xf32>
    %75 = arith.mulf %66, %20 : vector<2x32xf32>
    %76 = arith.mulf %60, %68 : vector<2x32xf32>
    %77 = arith.addf %75, %76 : vector<2x32xf32>
    %78 = math.tanh %77 : vector<2x32xf32>
    %79 = arith.mulf %74, %78 : vector<2x32xf32>
    %80 = vector.extract_strided_slice %11 {offsets = [1, 0, 0], sizes = [1, 2, 128], strides = [1, 1, 1]} : vector<4x2x128xf32> to vector<1x2x128xf32>
    %81 = vector.shape_cast %80 : vector<1x2x128xf32> to vector<2x128xf32>
    %82 = arith.truncf %50 : vector<2x32xf32> to vector<2x32xbf16>
    %cst_29 = arith.constant dense<0.000000e+00> : vector<2x128xf32>
    %83 = tpu.matmul %82, %12, %cst_29 {dimension_numbers = #tpu.dot_dimension_numbers<[1], [0], [0], [1], [0, 0, 1, 1], [], []>} : vector<2x32xbf16>, vector<32x128xbf16>, vector<2x128xf32> -> vector<2x128xf32>
    %84 = arith.addf %81, %83 : vector<2x128xf32>
    %85 = vector.extract_strided_slice %84 {offsets = [0, 0], sizes = [2, 32], strides = [1, 1]} : vector<2x128xf32> to vector<2x32xf32>
    %86 = arith.negf %85 : vector<2x32xf32>
    %87 = math.exp %86 : vector<2x32xf32>
    %cst_30 = arith.constant 1.000000e+00 : f32
    %88 = vector.broadcast %cst_30 : f32 to vector<2x32xf32>
    %89 = arith.addf %88, %87 : vector<2x32xf32>
    %90 = arith.divf %88, %89 : vector<2x32xf32>
    %91 = vector.extract_strided_slice %84 {offsets = [0, 32], sizes = [2, 32], strides = [1, 1]} : vector<2x128xf32> to vector<2x32xf32>
    %92 = arith.negf %91 : vector<2x32xf32>
    %93 = math.exp %92 : vector<2x32xf32>
    %cst_31 = arith.constant 1.000000e+00 : f32
    %94 = vector.broadcast %cst_31 : f32 to vector<2x32xf32>
    %95 = arith.addf %94, %93 : vector<2x32xf32>
    %96 = arith.divf %94, %95 : vector<2x32xf32>
    %97 = vector.extract_strided_slice %84 {offsets = [0, 64], sizes = [2, 32], strides = [1, 1]} : vector<2x128xf32> to vector<2x32xf32>
    %98 = math.tanh %97 : vector<2x32xf32>
    %99 = vector.extract_strided_slice %84 {offsets = [0, 96], sizes = [2, 32], strides = [1, 1]} : vector<2x128xf32> to vector<2x32xf32>
    %100 = arith.negf %99 : vector<2x32xf32>
    %101 = math.exp %100 : vector<2x32xf32>
    %cst_32 = arith.constant 1.000000e+00 : f32
    %102 = vector.broadcast %cst_32 : f32 to vector<2x32xf32>
    %103 = arith.addf %102, %101 : vector<2x32xf32>
    %104 = arith.divf %102, %103 : vector<2x32xf32>
    %105 = arith.mulf %96, %48 : vector<2x32xf32>
    %106 = arith.mulf %90, %98 : vector<2x32xf32>
    %107 = arith.addf %105, %106 : vector<2x32xf32>
    %108 = math.tanh %107 : vector<2x32xf32>
    %109 = arith.mulf %104, %108 : vector<2x32xf32>
    %110 = tpu.concatenate %109, %79 in 1 : vector<2x32xf32>, vector<2x32xf32> -> vector<2x64xf32>
    %111 = arith.truncf %110 : vector<2x64xf32> to vector<2x64xbf16>
    %cst_33 = arith.constant dense<0.000000e+00> : vector<2x128xf32>
    %112 = tpu.matmul %111, %13, %cst_33 {dimension_numbers = #tpu.dot_dimension_numbers<[1], [0], [0], [1], [0, 0, 1, 1], [], []>} : vector<2x64xbf16>, vector<64x128xbf16>, vector<2x128xf32> -> vector<2x128xf32>
    %113 = arith.addf %112, %16 : vector<2x128xf32>
    %114 = vector.extract_strided_slice %113 {offsets = [0, 0], sizes = [2, 32], strides = [1, 1]} : vector<2x128xf32> to vector<2x32xf32>
    %115 = arith.negf %114 : vector<2x32xf32>
    %116 = math.exp %115 : vector<2x32xf32>
    %cst_34 = arith.constant 1.000000e+00 : f32
    %117 = vector.broadcast %cst_34 : f32 to vector<2x32xf32>
    %118 = arith.addf %117, %116 : vector<2x32xf32>
    %119 = arith.divf %117, %118 : vector<2x32xf32>
    %120 = vector.extract_strided_slice %113 {offsets = [0, 32], sizes = [2, 32], strides = [1, 1]} : vector<2x128xf32> to vector<2x32xf32>
    %121 = arith.negf %120 : vector<2x32xf32>
    %122 = math.exp %121 : vector<2x32xf32>
    %cst_35 = arith.constant 1.000000e+00 : f32
    %123 = vector.broadcast %cst_35 : f32 to vector<2x32xf32>
    %124 = arith.addf %123, %122 : vector<2x32xf32>
    %125 = arith.divf %123, %124 : vector<2x32xf32>
    %126 = vector.extract_strided_slice %113 {offsets = [0, 64], sizes = [2, 32], strides = [1, 1]} : vector<2x128xf32> to vector<2x32xf32>
    %127 = math.tanh %126 : vector<2x32xf32>
    %128 = vector.extract_strided_slice %113 {offsets = [0, 96], sizes = [2, 32], strides = [1, 1]} : vector<2x128xf32> to vector<2x32xf32>
    %129 = arith.negf %128 : vector<2x32xf32>
    %130 = math.exp %129 : vector<2x32xf32>
    %cst_36 = arith.constant 1.000000e+00 : f32
    %131 = vector.broadcast %cst_36 : f32 to vector<2x32xf32>
    %132 = arith.addf %131, %130 : vector<2x32xf32>
    %133 = arith.divf %131, %132 : vector<2x32xf32>
    %134 = arith.mulf %125, %77 : vector<2x32xf32>
    %135 = arith.mulf %119, %127 : vector<2x32xf32>
    %136 = arith.addf %134, %135 : vector<2x32xf32>
    %137 = math.tanh %136 : vector<2x32xf32>
    %138 = arith.mulf %133, %137 : vector<2x32xf32>
    %139 = vector.extract_strided_slice %11 {offsets = [2, 0, 0], sizes = [1, 2, 128], strides = [1, 1, 1]} : vector<4x2x128xf32> to vector<1x2x128xf32>
    %140 = vector.shape_cast %139 : vector<1x2x128xf32> to vector<2x128xf32>
    %141 = arith.truncf %109 : vector<2x32xf32> to vector<2x32xbf16>
    %cst_37 = arith.constant dense<0.000000e+00> : vector<2x128xf32>
    %142 = tpu.matmul %141, %12, %cst_37 {dimension_numbers = #tpu.dot_dimension_numbers<[1], [0], [0], [1], [0, 0, 1, 1], [], []>} : vector<2x32xbf16>, vector<32x128xbf16>, vector<2x128xf32> -> vector<2x128xf32>
    %143 = arith.addf %140, %142 : vector<2x128xf32>
    %144 = vector.extract_strided_slice %143 {offsets = [0, 0], sizes = [2, 32], strides = [1, 1]} : vector<2x128xf32> to vector<2x32xf32>
    %145 = arith.negf %144 : vector<2x32xf32>
    %146 = math.exp %145 : vector<2x32xf32>
    %cst_38 = arith.constant 1.000000e+00 : f32
    %147 = vector.broadcast %cst_38 : f32 to vector<2x32xf32>
    %148 = arith.addf %147, %146 : vector<2x32xf32>
    %149 = arith.divf %147, %148 : vector<2x32xf32>
    %150 = vector.extract_strided_slice %143 {offsets = [0, 32], sizes = [2, 32], strides = [1, 1]} : vector<2x128xf32> to vector<2x32xf32>
    %151 = arith.negf %150 : vector<2x32xf32>
    %152 = math.exp %151 : vector<2x32xf32>
    %cst_39 = arith.constant 1.000000e+00 : f32
    %153 = vector.broadcast %cst_39 : f32 to vector<2x32xf32>
    %154 = arith.addf %153, %152 : vector<2x32xf32>
    %155 = arith.divf %153, %154 : vector<2x32xf32>
    %156 = vector.extract_strided_slice %143 {offsets = [0, 64], sizes = [2, 32], strides = [1, 1]} : vector<2x128xf32> to vector<2x32xf32>
    %157 = math.tanh %156 : vector<2x32xf32>
    %158 = vector.extract_strided_slice %143 {offsets = [0, 96], sizes = [2, 32], strides = [1, 1]} : vector<2x128xf32> to vector<2x32xf32>
    %159 = arith.negf %158 : vector<2x32xf32>
    %160 = math.exp %159 : vector<2x32xf32>
    %cst_40 = arith.constant 1.000000e+00 : f32
    %161 = vector.broadcast %cst_40 : f32 to vector<2x32xf32>
    %162 = arith.addf %161, %160 : vector<2x32xf32>
    %163 = arith.divf %161, %162 : vector<2x32xf32>
    %164 = arith.mulf %155, %107 : vector<2x32xf32>
    %165 = arith.mulf %149, %157 : vector<2x32xf32>
    %166 = arith.addf %164, %165 : vector<2x32xf32>
    %167 = math.tanh %166 : vector<2x32xf32>
    %168 = arith.mulf %163, %167 : vector<2x32xf32>
    %169 = tpu.concatenate %168, %138 in 1 : vector<2x32xf32>, vector<2x32xf32> -> vector<2x64xf32>
    %170 = arith.truncf %169 : vector<2x64xf32> to vector<2x64xbf16>
    %cst_41 = arith.constant dense<0.000000e+00> : vector<2x128xf32>
    %171 = tpu.matmul %170, %13, %cst_41 {dimension_numbers = #tpu.dot_dimension_numbers<[1], [0], [0], [1], [0, 0, 1, 1], [], []>} : vector<2x64xbf16>, vector<64x128xbf16>, vector<2x128xf32> -> vector<2x128xf32>
    %172 = arith.addf %171, %16 : vector<2x128xf32>
    %173 = vector.extract_strided_slice %172 {offsets = [0, 0], sizes = [2, 32], strides = [1, 1]} : vector<2x128xf32> to vector<2x32xf32>
    %174 = arith.negf %173 : vector<2x32xf32>
    %175 = math.exp %174 : vector<2x32xf32>
    %cst_42 = arith.constant 1.000000e+00 : f32
    %176 = vector.broadcast %cst_42 : f32 to vector<2x32xf32>
    %177 = arith.addf %176, %175 : vector<2x32xf32>
    %178 = arith.divf %176, %177 : vector<2x32xf32>
    %179 = vector.extract_strided_slice %172 {offsets = [0, 32], sizes = [2, 32], strides = [1, 1]} : vector<2x128xf32> to vector<2x32xf32>
    %180 = arith.negf %179 : vector<2x32xf32>
    %181 = math.exp %180 : vector<2x32xf32>
    %cst_43 = arith.constant 1.000000e+00 : f32
    %182 = vector.broadcast %cst_43 : f32 to vector<2x32xf32>
    %183 = arith.addf %182, %181 : vector<2x32xf32>
    %184 = arith.divf %182, %183 : vector<2x32xf32>
    %185 = vector.extract_strided_slice %172 {offsets = [0, 64], sizes = [2, 32], strides = [1, 1]} : vector<2x128xf32> to vector<2x32xf32>
    %186 = math.tanh %185 : vector<2x32xf32>
    %187 = vector.extract_strided_slice %172 {offsets = [0, 96], sizes = [2, 32], strides = [1, 1]} : vector<2x128xf32> to vector<2x32xf32>
    %188 = arith.negf %187 : vector<2x32xf32>
    %189 = math.exp %188 : vector<2x32xf32>
    %cst_44 = arith.constant 1.000000e+00 : f32
    %190 = vector.broadcast %cst_44 : f32 to vector<2x32xf32>
    %191 = arith.addf %190, %189 : vector<2x32xf32>
    %192 = arith.divf %190, %191 : vector<2x32xf32>
    %193 = arith.mulf %184, %136 : vector<2x32xf32>
    %194 = arith.mulf %178, %186 : vector<2x32xf32>
    %195 = arith.addf %193, %194 : vector<2x32xf32>
    %196 = math.tanh %195 : vector<2x32xf32>
    %197 = arith.mulf %192, %196 : vector<2x32xf32>
    %198 = vector.extract_strided_slice %11 {offsets = [3, 0, 0], sizes = [1, 2, 128], strides = [1, 1, 1]} : vector<4x2x128xf32> to vector<1x2x128xf32>
    %199 = vector.shape_cast %198 : vector<1x2x128xf32> to vector<2x128xf32>
    %200 = arith.truncf %168 : vector<2x32xf32> to vector<2x32xbf16>
    %cst_45 = arith.constant dense<0.000000e+00> : vector<2x128xf32>
    %201 = tpu.matmul %200, %12, %cst_45 {dimension_numbers = #tpu.dot_dimension_numbers<[1], [0], [0], [1], [0, 0, 1, 1], [], []>} : vector<2x32xbf16>, vector<32x128xbf16>, vector<2x128xf32> -> vector<2x128xf32>
    %202 = arith.addf %199, %201 : vector<2x128xf32>
    %203 = vector.extract_strided_slice %202 {offsets = [0, 0], sizes = [2, 32], strides = [1, 1]} : vector<2x128xf32> to vector<2x32xf32>
    %204 = arith.negf %203 : vector<2x32xf32>
    %205 = math.exp %204 : vector<2x32xf32>
    %cst_46 = arith.constant 1.000000e+00 : f32
    %206 = vector.broadcast %cst_46 : f32 to vector<2x32xf32>
    %207 = arith.addf %206, %205 : vector<2x32xf32>
    %208 = arith.divf %206, %207 : vector<2x32xf32>
    %209 = vector.extract_strided_slice %202 {offsets = [0, 32], sizes = [2, 32], strides = [1, 1]} : vector<2x128xf32> to vector<2x32xf32>
    %210 = arith.negf %209 : vector<2x32xf32>
    %211 = math.exp %210 : vector<2x32xf32>
    %cst_47 = arith.constant 1.000000e+00 : f32
    %212 = vector.broadcast %cst_47 : f32 to vector<2x32xf32>
    %213 = arith.addf %212, %211 : vector<2x32xf32>
    %214 = arith.divf %212, %213 : vector<2x32xf32>
    %215 = vector.extract_strided_slice %202 {offsets = [0, 64], sizes = [2, 32], strides = [1, 1]} : vector<2x128xf32> to vector<2x32xf32>
    %216 = math.tanh %215 : vector<2x32xf32>
    %217 = vector.extract_strided_slice %202 {offsets = [0, 96], sizes = [2, 32], strides = [1, 1]} : vector<2x128xf32> to vector<2x32xf32>
    %218 = arith.negf %217 : vector<2x32xf32>
    %219 = math.exp %218 : vector<2x32xf32>
    %cst_48 = arith.constant 1.000000e+00 : f32
    %220 = vector.broadcast %cst_48 : f32 to vector<2x32xf32>
    %221 = arith.addf %220, %219 : vector<2x32xf32>
    %222 = arith.divf %220, %221 : vector<2x32xf32>
    %223 = arith.mulf %214, %166 : vector<2x32xf32>
    %224 = arith.mulf %208, %216 : vector<2x32xf32>
    %225 = arith.addf %223, %224 : vector<2x32xf32>
    %226 = math.tanh %225 : vector<2x32xf32>
    %227 = arith.mulf %222, %226 : vector<2x32xf32>
    %228 = tpu.concatenate %227, %197 in 1 : vector<2x32xf32>, vector<2x32xf32> -> vector<2x64xf32>
    %229 = arith.truncf %228 : vector<2x64xf32> to vector<2x64xbf16>
    %cst_49 = arith.constant dense<0.000000e+00> : vector<2x128xf32>
    %230 = tpu.matmul %229, %13, %cst_49 {dimension_numbers = #tpu.dot_dimension_numbers<[1], [0], [0], [1], [0, 0, 1, 1], [], []>} : vector<2x64xbf16>, vector<64x128xbf16>, vector<2x128xf32> -> vector<2x128xf32>
    %231 = arith.addf %230, %16 : vector<2x128xf32>
    %232 = vector.extract_strided_slice %231 {offsets = [0, 0], sizes = [2, 32], strides = [1, 1]} : vector<2x128xf32> to vector<2x32xf32>
    %233 = arith.negf %232 : vector<2x32xf32>
    %234 = math.exp %233 : vector<2x32xf32>
    %cst_50 = arith.constant 1.000000e+00 : f32
    %235 = vector.broadcast %cst_50 : f32 to vector<2x32xf32>
    %236 = arith.addf %235, %234 : vector<2x32xf32>
    %237 = arith.divf %235, %236 : vector<2x32xf32>
    %238 = vector.extract_strided_slice %231 {offsets = [0, 32], sizes = [2, 32], strides = [1, 1]} : vector<2x128xf32> to vector<2x32xf32>
    %239 = arith.negf %238 : vector<2x32xf32>
    %240 = math.exp %239 : vector<2x32xf32>
    %cst_51 = arith.constant 1.000000e+00 : f32
    %241 = vector.broadcast %cst_51 : f32 to vector<2x32xf32>
    %242 = arith.addf %241, %240 : vector<2x32xf32>
    %243 = arith.divf %241, %242 : vector<2x32xf32>
    %244 = vector.extract_strided_slice %231 {offsets = [0, 64], sizes = [2, 32], strides = [1, 1]} : vector<2x128xf32> to vector<2x32xf32>
    %245 = math.tanh %244 : vector<2x32xf32>
    %246 = vector.extract_strided_slice %231 {offsets = [0, 96], sizes = [2, 32], strides = [1, 1]} : vector<2x128xf32> to vector<2x32xf32>
    %247 = arith.negf %246 : vector<2x32xf32>
    %248 = math.exp %247 : vector<2x32xf32>
    %cst_52 = arith.constant 1.000000e+00 : f32
    %249 = vector.broadcast %cst_52 : f32 to vector<2x32xf32>
    %250 = arith.addf %249, %248 : vector<2x32xf32>
    %251 = arith.divf %249, %250 : vector<2x32xf32>
    %252 = arith.mulf %243, %195 : vector<2x32xf32>
    %253 = arith.mulf %237, %245 : vector<2x32xf32>
    %254 = arith.addf %252, %253 : vector<2x32xf32>
    %255 = math.tanh %254 : vector<2x32xf32>
    %256 = arith.mulf %251, %255 : vector<2x32xf32>
    %c0_53 = arith.constant 0 : index
    %c0_54 = arith.constant 0 : index
    %257 = vector.load %arg10[%c0_53, %c0_54] : memref<2x32xf32, #tpu.memory_space<vmem>>, vector<2x32xf32>
    tpu.vector_store %arg10[%c0_53, %c0_54], %227 {strides = array<i32>} : memref<2x32xf32, #tpu.memory_space<vmem>>, vector<2x32xf32>,
    %c0_55 = arith.constant 0 : index
    %c0_56 = arith.constant 0 : index
    %258 = vector.load %arg11[%c0_55, %c0_56] : memref<2x32xf32, #tpu.memory_space<vmem>>, vector<2x32xf32>
    tpu.vector_store %arg11[%c0_55, %c0_56], %225 {strides = array<i32>} : memref<2x32xf32, #tpu.memory_space<vmem>>, vector<2x32xf32>,
    %c0_57 = arith.constant 0 : index
    %c0_58 = arith.constant 0 : index
    %259 = vector.load %arg12[%c0_57, %c0_58] : memref<2x32xf32, #tpu.memory_space<vmem>>, vector<2x32xf32>
    tpu.vector_store %arg12[%c0_57, %c0_58], %256 {strides = array<i32>} : memref<2x32xf32, #tpu.memory_space<vmem>>, vector<2x32xf32>,
    %c0_59 = arith.constant 0 : index
    %c0_60 = arith.constant 0 : index
    %260 = vector.load %arg13[%c0_59, %c0_60] : memref<2x32xf32, #tpu.memory_space<vmem>>, vector<2x32xf32>
    tpu.vector_store %arg13[%c0_59, %c0_60], %254 {strides = array<i32>} : memref<2x32xf32, #tpu.memory_space<vmem>>, vector<2x32xf32>,
    %c1_i32 = arith.constant 1 : i32
    %261 = arith.cmpi eq, %arg0, %c1_i32 : i32
    %262 = arith.extui %261 : i1 to i32
    %c0_i32_61 = arith.constant 0 : i32
    %263 = arith.cmpi ne, %262, %c0_i32_61 : i32
    scf.if %263 {
      %264 = arith.truncf %256 : vector<2x32xf32> to vector<2x32xbf16>
      %c0_62 = arith.constant 0 : index
      %c0_63 = arith.constant 0 : index
      %265 = vector.load %arg7[%c0_62, %c0_63] : memref<32x5xbf16, #tpu.memory_space<vmem>>, vector<32x5xbf16>
      %cst_64 = arith.constant dense<0.000000e+00> : vector<2x5xf32>
      %266 = tpu.matmul %264, %265, %cst_64 {dimension_numbers = #tpu.dot_dimension_numbers<[1], [0], [0], [1], [0, 0, 1, 1], [], []>} : vector<2x32xbf16>, vector<32x5xbf16>, vector<2x5xf32> -> vector<2x5xf32>
      %c0_65 = arith.constant 0 : index
      %c0_66 = arith.constant 0 : index
      %267 = vector.load %arg8[%c0_65, %c0_66] : memref<1x5xf32, #tpu.memory_space<vmem>>, vector<1x5xf32>
      %268 = vector.broadcast %267 : vector<1x5xf32> to vector<2x5xf32>
      %269 = arith.addf %266, %268 : vector<2x5xf32>
      %c0_67 = arith.constant 0 : index
      %c0_68 = arith.constant 0 : index
      %270 = vector.load %arg9[%c0_67, %c0_68] : memref<2x5xf32, #tpu.memory_space<vmem>>, vector<2x5xf32>
      tpu.vector_store %arg9[%c0_67, %c0_68], %269 {strides = array<i32>} : memref<2x5xf32, #tpu.memory_space<vmem>>, vector<2x5xf32>,
    } else {
    }
    return
  }
  func.func @transform_0(%arg0: i32) -> (i32, i32, i32) {
    %c0_i32 = arith.constant 0 : i32
    %c0_i32_0 = arith.constant 0 : i32
    %c0_i32_1 = arith.constant 0 : i32
    return %arg0, %c0_i32, %c0_i32_0 : i32, i32, i32
  }
  func.func @transform_1(%arg0: i32) -> (i32, i32) {
    %c0_i32 = arith.constant 0 : i32
    %c0_i32_0 = arith.constant 0 : i32
    %c0_i32_1 = arith.constant 0 : i32
    return %c0_i32, %c0_i32_0 : i32, i32
  }
  func.func @transform_2(%arg0: i32) -> (i32, i32) {
    %c0_i32 = arith.constant 0 : i32
    %c0_i32_0 = arith.constant 0 : i32
    %c0_i32_1 = arith.constant 0 : i32
    return %c0_i32, %c0_i32_0 : i32, i32
  }
  func.func @transform_3(%arg0: i32) -> (i32, i32) {
    %c0_i32 = arith.constant 0 : i32
    %c0_i32_0 = arith.constant 0 : i32
    %c0_i32_1 = arith.constant 0 : i32
    return %c0_i32, %c0_i32_0 : i32, i32
  }
  func.func @transform_4(%arg0: i32) -> (i32, i32) {
    %c0_i32 = arith.constant 0 : i32
    %c0_i32_0 = arith.constant 0 : i32
    %c0_i32_1 = arith.constant 0 : i32
    return %c0_i32, %c0_i32_0 : i32, i32
  }
  func.func @transform_5(%arg0: i32) -> (i32, i32) {
    %c0_i32 = arith.constant 0 : i32
    %c0_i32_0 = arith.constant 0 : i32
    %c0_i32_1 = arith.constant 0 : i32
    return %c0_i32, %c0_i32_0 : i32, i32
  }
  func.func @transform_6(%arg0: i32) -> (i32, i32) {
    %c0_i32 = arith.constant 0 : i32
    %c0_i32_0 = arith.constant 0 : i32
    %c0_i32_1 = arith.constant 0 : i32
    return %c0_i32, %c0_i32_0 : i32, i32
  }
  func.func @transform_7(%arg0: i32) -> (i32, i32) {
    %c0_i32 = arith.constant 0 : i32
    %c0_i32_0 = arith.constant 0 : i32
    %c0_i32_1 = arith.constant 0 : i32
    return %c0_i32, %c0_i32_0 : i32, i32
  }
  func.func @transform_8(%arg0: i32) -> (i32, i32) {
    %c0_i32 = arith.constant 0 : i32
    %c0_i32_0 = arith.constant 0 : i32
    %c0_i32_1 = arith.constant 0 : i32
    return %c0_i32, %c0_i32_0 : i32, i32
  }
}

</mosaic_0001>

<llo_original>
// kernel: tpu_custom_call.1
$region0: #{tpu_custom_call.1}
  #allocation0 [shape = 'u32[]', space=smem, size = 0x4, offset = 0x4, fixed_abs, tag = 'smem constant byte address 0x4 - core index']
  #allocation1 [shape = 'u32[72,128]{1,0:T(1,128)}', space=vmem, size = 0x9000, scoped, tag = 'internal scratch']
  #allocation2 [shape = 'f32[2,32]{1,0:T(2,128)}', space=vmem, size = 0x400, scoped, tag = 'scratch operand']
  #allocation3 [shape = 'f32[2,32]{1,0:T(2,128)}', space=vmem, size = 0x400, scoped, tag = 'scratch operand']
  #allocation4 [shape = 'f32[2,32]{1,0:T(2,128)}', space=vmem, size = 0x400, scoped, tag = 'scratch operand']
  #allocation5 [shape = 'f32[2,32]{1,0:T(2,128)}', space=vmem, size = 0x400, scoped, tag = 'scratch operand']
  %s0 = inlined_call_operand.hbm [shape: bf16[8,2,16], index: 0, kind: input, shape index: {}]
  %s1 = inlined_call_operand.hbm [shape: bf16[16,128], index: 1, kind: input, shape index: {}]
  %s2 = inlined_call_operand.vmem [shape: bf16[32,128], index: 2, kind: input, shape index: {}]
  %s3 = inlined_call_operand.vmem [shape: f32[1,128], index: 3, kind: input, shape index: {}]
  %s4 = inlined_call_operand.hbm [shape: bf16[64,128], index: 4, kind: input, shape index: {}]
  %s5 = inlined_call_operand.vmem [shape: f32[1,128], index: 5, kind: input, shape index: {}]
  %s6 = inlined_call_operand.vmem [shape: bf16[32,5], index: 6, kind: input, shape index: {}]
  %s7 = inlined_call_operand.vmem [shape: f32[1,5], index: 7, kind: input, shape index: {}]
  %s8 = inlined_call_operand.hbm [shape: f32[2,5], index: 8, kind: output, shape index: {}]
  %s9 = sld [smem:[#allocation0]]
  $region85: #{tpu_custom_call.1} parent=0
    _
  %s11 = ssub.s32 1, %s9
  %s12 = scalar_select 0, %s11, %s9
  $region1: #{tpu_custom_call.1} parent=0
    #allocation6 [shape = 'u8[4096]{0}', space=vmem, size = 0x1000, scoped, tag = 'input window, operand 0']
    #allocation7 [shape = 's32[2]{0}', space=sflag, size = 0x8, scoped, tag = 'scoped memory for tpu_custom_call.1']
    #allocation8 [shape = 's32[2]{0}', space=sflag, size = 0x8, scoped, tag = 'scoped memory for tpu_custom_call.1']
    #allocation9 [shape = 'u8[4096]{0}', space=vmem, size = 0x1000, scoped, tag = 'input window, operand 1, single buffered']
    #allocation10 [shape = 's32[1]{0}', space=sflag, size = 0x4, scoped, tag = 'scoped memory for tpu_custom_call.1']
    #allocation11 [shape = 'u8[16384]{0}', space=vmem, size = 0x4000, scoped, tag = 'input window, operand 4, single buffered']
    #allocation12 [shape = 'u8[1024]{0}', space=vmem, size = 0x400, scoped, tag = 'output window, operand 0, single buffered']
    %13 = vsyncpa [#allocation7], 0
    %s14 = scalar_lea.sflag [#allocation7], 1
    %15 = vsyncpa %s14, 0
    %16 = vsyncpa [#allocation10], 0
    %17 = vsyncpa [#allocation8], 0
    loop: start=0, step=1, limit=4
    $region2: #{tpu_custom_call.1} parent=1 // loop_pre_header
      _
    $region3: #{tpu_custom_call.1} parent=1 // loop_header
      %s19 = sphi 0, %s23
      %p20 = scmp.ge.s32.totalorder %s19, 4
      %s29 = sphi 0, %s31
      %s32 = sphi 0, %s29
      %s33 = sphi 0, %s32
      %s49 = sphi 0, %s33
      %s53 = sphi 0, %s53
      %s55 = sphi 0, %s53
      %s56 = sphi 0, %s55
      %s70 = sphi 0, %s56
      %s74 = sphi 0, %s74
      %s76 = sphi 0, %s74
      %s77 = sphi 0, %s76
      %s91 = sphi 0, %s77
      %s95 = sphi 0, %s95
      %s97 = sphi 0, %s95
      %s98 = sphi 0, %s97
      %s112 = sphi 0, %s98
      %s116 = sphi 0, %s116
      %s118 = sphi 0, %s116
      %s119 = sphi 0, %s118
      %s133 = sphi 0, %s119
      %s137 = sphi 0, %s137
      %s139 = sphi 0, %s137
      %s140 = sphi 0, %s139
      %s154 = sphi 0, %s140
      %s158 = sphi 0, %s158
      %s160 = sphi 0, %s158
      %s161 = sphi 0, %s160
      %s175 = sphi 0, %s161
      %s179 = sphi 0, %s179
      %s181 = sphi 0, %s179
      %s182 = sphi 0, %s181
      %s196 = sphi 0, %s182
      %s200 = sphi 0, %s200
      %s202 = sphi 0, %s200
      %s203 = sphi 0, %s202
      %s217 = sphi 0, %s203
    $region4: #{tpu_custom_call.1} parent=1 // loop_header_branch
      %22 = sbr.rel (%p20) target = $region8
    $region5: #{tpu_custom_call.1} parent=1 // loop_body
      %s24 = ssub.s32 %s19, 1
      %s25 = ssub.s32 %s19, 2
      %s26 = sadd.s32 %s19, 1
      %s27 = ssub.s32 %s19, %s26
      %p28 = scmp.eq.s32.totalorder %s27, 0
      %s30 = sadd.s32 %s29, 1
      %s31 = scalar_select %p28, %s29, %s30
      %p34 = pneg %p28
      %p35 = scmp.eq.s32.totalorder %s19, 1
      %p36 = por %p34, %p35
      %p37 = scmp.ne.s32.totalorder %s29, %s32
      %p38 = scmp.eq.s32.totalorder %s19, 0
      %p39 = por %p37, %p38
      %p40 = scmp.ne.s32.totalorder %s29, %s32
      %p41 = scmp.eq.s32.totalorder %s24, 1
      %p42 = por %p40, %p41
      %p43 = scmp.ne.s32.totalorder %s32, %s33
      %p44 = scmp.eq.s32.totalorder %s24, 0
      %p45 = por %p43, %p44
      %p46 = scmp.ne.s32.totalorder %s32, %s33
      %p47 = scmp.eq.s32.totalorder %s25, 1
      %p48 = por %p46, %p47
      %p50 = scmp.ne.s32.totalorder %s33, %s49
      %p51 = scmp.eq.s32.totalorder %s25, 0
      %p52 = por %p50, %p51
      %s54 = sadd.s32 %s53, 1
      %p57 = scmp.eq.s32.totalorder %s19, 1
      %p58 = scmp.ne.s32.totalorder %s53, %s55
      %p59 = scmp.eq.s32.totalorder %s19, 0
      %p60 = por %p58, %p59
      %p61 = scmp.ne.s32.totalorder %s53, %s55
      %p62 = scmp.eq.s32.totalorder %s24, 1
      %p63 = por %p61, %p62
      %p64 = scmp.ne.s32.totalorder %s55, %s56
      %p65 = scmp.eq.s32.totalorder %s24, 0
      %p66 = por %p64, %p65
      %p67 = scmp.ne.s32.totalorder %s55, %s56
      %p68 = scmp.eq.s32.totalorder %s25, 1
      %p69 = por %p67, %p68
      %p71 = scmp.ne.s32.totalorder %s56, %s70
      %p72 = scmp.eq.s32.totalorder %s25, 0
      %p73 = por %p71, %p72
      %s75 = sadd.s32 %s74, 1
      %p78 = scmp.eq.s32.totalorder %s19, 1
      %p79 = scmp.ne.s32.totalorder %s74, %s76
      %p80 = scmp.eq.s32.totalorder %s19, 0
      %p81 = por %p79, %p80
      %p82 = scmp.ne.s32.totalorder %s74, %s76
      %p83 = scmp.eq.s32.totalorder %s24, 1
      %p84 = por %p82, %p83
      %p85 = scmp.ne.s32.totalorder %s76, %s77
      %p86 = scmp.eq.s32.totalorder %s24, 0
      %p87 = por %p85, %p86
      %p88 = scmp.ne.s32.totalorder %s76, %s77
      %p89 = scmp.eq.s32.totalorder %s25, 1
      %p90 = por %p88, %p89
      %p92 = scmp.ne.s32.totalorder %s77, %s91
      %p93 = scmp.eq.s32.totalorder %s25, 0
      %p94 = por %p92, %p93
      %s96 = sadd.s32 %s95, 1
      %p99 = scmp.eq.s32.totalorder %s19, 1
      %p100 = scmp.ne.s32.totalorder %s95, %s97
      %p101 = scmp.eq.s32.totalorder %s19, 0
      %p102 = por %p100, %p101
      %p103 = scmp.ne.s32.totalorder %s95, %s97
      %p104 = scmp.eq.s32.totalorder %s24, 1
      %p105 = por %p103, %p104
      %p106 = scmp.ne.s32.totalorder %s97, %s98
      %p107 = scmp.eq.s32.totalorder %s24, 0
      %p108 = por %p106, %p107
      %p109 = scmp.ne.s32.totalorder %s97, %s98
      %p110 = scmp.eq.s32.totalorder %s25, 1
      %p111 = por %p109, %p110
      %p113 = scmp.ne.s32.totalorder %s98, %s112
      %p114 = scmp.eq.s32.totalorder %s25, 0
      %p115 = por %p113, %p114
      %s117 = sadd.s32 %s116, 1
      %p120 = scmp.eq.s32.totalorder %s19, 1
      %p121 = scmp.ne.s32.totalorder %s116, %s118
      %p122 = scmp.eq.s32.totalorder %s19, 0
      %p123 = por %p121, %p122
      %p124 = scmp.ne.s32.totalorder %s116, %s118
      %p125 = scmp.eq.s32.totalorder %s24, 1
      %p126 = por %p124, %p125
      %p127 = scmp.ne.s32.totalorder %s118, %s119
      %p128 = scmp.eq.s32.totalorder %s24, 0
      %p129 = por %p127, %p128
      %p130 = scmp.ne.s32.totalorder %s118, %s119
      %p131 = scmp.eq.s32.totalorder %s25, 1
      %p132 = por %p130, %p131
      %p134 = scmp.ne.s32.totalorder %s119, %s133
      %p135 = scmp.eq.s32.totalorder %s25, 0
      %p136 = por %p134, %p135
      %s138 = sadd.s32 %s137, 1
      %p141 = scmp.eq.s32.totalorder %s19, 1
      %p142 = scmp.ne.s32.totalorder %s137, %s139
      %p143 = scmp.eq.s32.totalorder %s19, 0
      %p144 = por %p142, %p143
      %p145 = scmp.ne.s32.totalorder %s137, %s139
      %p146 = scmp.eq.s32.totalorder %s24, 1
      %p147 = por %p145, %p146
      %p148 = scmp.ne.s32.totalorder %s139, %s140
      %p149 = scmp.eq.s32.totalorder %s24, 0
      %p150 = por %p148, %p149
      %p151 = scmp.ne.s32.totalorder %s139, %s140
      %p152 = scmp.eq.s32.totalorder %s25, 1
      %p153 = por %p151, %p152
      %p155 = scmp.ne.s32.totalorder %s140, %s154
      %p156 = scmp.eq.s32.totalorder %s25, 0
      %p157 = por %p155, %p156
      %s159 = sadd.s32 %s158, 1
      %p162 = scmp.eq.s32.totalorder %s19, 1
      %p163 = scmp.ne.s32.totalorder %s158, %s160
      %p164 = scmp.eq.s32.totalorder %s19, 0
      %p165 = por %p163, %p164
      %p166 = scmp.ne.s32.totalorder %s158, %s160
      %p167 = scmp.eq.s32.totalorder %s24, 1
      %p168 = por %p166, %p167
      %p169 = scmp.ne.s32.totalorder %s160, %s161
      %p170 = scmp.eq.s32.totalorder %s24, 0
      %p171 = por %p169, %p170
      %p172 = scmp.ne.s32.totalorder %s160, %s161
      %p173 = scmp.eq.s32.totalorder %s25, 1
      %p174 = por %p172, %p173
      %p176 = scmp.ne.s32.totalorder %s161, %s175
      %p177 = scmp.eq.s32.totalorder %s25, 0
      %p178 = por %p176, %p177
      %s180 = sadd.s32 %s179, 1
      %p183 = scmp.eq.s32.totalorder %s19, 1
      %p184 = scmp.ne.s32.totalorder %s179, %s181
      %p185 = scmp.eq.s32.totalorder %s19, 0
      %p186 = por %p184, %p185
      %p187 = scmp.ne.s32.totalorder %s179, %s181
      %p188 = scmp.eq.s32.totalorder %s24, 1
      %p189 = por %p187, %p188
      %p190 = scmp.ne.s32.totalorder %s181, %s182
      %p191 = scmp.eq.s32.totalorder %s24, 0
      %p192 = por %p190, %p191
      %p193 = scmp.ne.s32.totalorder %s181, %s182
      %p194 = scmp.eq.s32.totalorder %s25, 1
      %p195 = por %p193, %p194
      %p197 = scmp.ne.s32.totalorder %s182, %s196
      %p198 = scmp.eq.s32.totalorder %s25, 0
      %p199 = por %p197, %p198
      %s201 = sadd.s32 %s200, 1
      %p204 = scmp.eq.s32.totalorder %s19, 1
      %p205 = scmp.ne.s32.totalorder %s200, %s202
      %p206 = scmp.eq.s32.totalorder %s19, 0
      %p207 = por %p205, %p206
      %p208 = scmp.ne.s32.totalorder %s200, %s202
      %p209 = scmp.eq.s32.totalorder %s24, 1
      %p210 = por %p208, %p209
      %p211 = scmp.ne.s32.totalorder %s202, %s203
      %p212 = scmp.eq.s32.totalorder %s24, 0
      %p213 = por %p211, %p212
      %p214 = scmp.ne.s32.totalorder %s202, %s203
      %p215 = scmp.eq.s32.totalorder %s25, 1
      %p216 = por %p214, %p215
      %p218 = scmp.ne.s32.totalorder %s203, %s217
      %p219 = scmp.eq.s32.totalorder %s25, 0
      %p220 = por %p218, %p219
      %p221 = scmp.le.s32.totalorder 1, %s19
      %p222 = scmp.lt.s32.totalorder %s19, 3
      %p223 = pnand %p221, %p222
      %p224 = pneg %p223
      // Predicated region
      $region9: #{tpu_custom_call.1} parent=5 // pred_check
        _
      $region10: #{tpu_custom_call.1} parent=5 // pred_check_branch
        %226 = sbr.rel (%p223) target = $region12
      $region11: #{tpu_custom_call.1} parent=5 // pred_region
        %s227 = ssub.s32 %s19, 1
        // Predicated region
        $region13: #{tpu_custom_call.1} parent=11 // pred_check
          %p228 = pneg %p66
        $region14: #{tpu_custom_call.1} parent=11 // pred_check_branch
          %230 = sbr.rel (%p228) target = $region16
        $region15: #{tpu_custom_call.1} parent=11 // pred_region
          %232 = vsyncadd [#allocation10], 0
          %s233 = sshll.u32 %s1, 4
          %s234 = int_to_ptr.hbm [resolvable:$true] %s233
          %s235 = sshll.u32 [#allocation9], 4
          %s236 = int_to_ptr.vmem [resolvable:$true] %s235
          %241 = dma.hbm_to_vmem [thread:$0]  %s234, 128, %s236, [#allocation10], 64, 64, 4
        $region16: #{tpu_custom_call.1} parent=11 // pred_fallthru
          _
        // Predicated region
        $region17: #{tpu_custom_call.1} parent=11 // pred_check
          %p242 = pneg %p87
        $region18: #{tpu_custom_call.1} parent=11 // pred_check_branch
          %244 = sbr.rel (%p242) target = $region20
        $region19: #{tpu_custom_call.1} parent=11 // pred_region
          _
        $region20: #{tpu_custom_call.1} parent=11 // pred_fallthru
          _
        // Predicated region
        $region21: #{tpu_custom_call.1} parent=11 // pred_check
          %p245 = pneg %p108
        $region22: #{tpu_custom_call.1} parent=11 // pred_check_branch
          %247 = sbr.rel (%p245) target = $region24
        $region23: #{tpu_custom_call.1} parent=11 // pred_region
          _
        $region24: #{tpu_custom_call.1} parent=11 // pred_fallthru
          _
        // Predicated region
        $region25: #{tpu_custom_call.1} parent=11 // pred_check
          %p248 = pneg %p129
        $region26: #{tpu_custom_call.1} parent=11 // pred_check_branch
          %250 = sbr.rel (%p248) target = $region28
        $region27: #{tpu_custom_call.1} parent=11 // pred_region
          %252 = vsyncadd [#allocation10], 0
          %s253 = sshll.u32 %s4, 4
          %s254 = int_to_ptr.hbm [resolvable:$true] %s253
          %s255 = sshll.u32 [#allocation11], 4
          %s256 = int_to_ptr.vmem [resolvable:$true] %s255
          %261 = dma.hbm_to_vmem [thread:$0]  %s254, 512, %s256, [#allocation10], 64, 64, 4
        $region28: #{tpu_custom_call.1} parent=11 // pred_fallthru
          _
        // Predicated region
        $region29: #{tpu_custom_call.1} parent=11 // pred_check
          %p262 = pneg %p150
        $region30: #{tpu_custom_call.1} parent=11 // pred_check_branch
          %264 = sbr.rel (%p262) target = $region32
        $region31: #{tpu_custom_call.1} parent=11 // pred_region
          _
        $region32: #{tpu_custom_call.1} parent=11 // pred_fallthru
          _
        // Predicated region
        $region33: #{tpu_custom_call.1} parent=11 // pred_check
          %p265 = pneg %p171
        $region34: #{tpu_custom_call.1} parent=11 // pred_check_branch
          %267 = sbr.rel (%p265) target = $region36
        $region35: #{tpu_custom_call.1} parent=11 // pred_region
          _
        $region36: #{tpu_custom_call.1} parent=11 // pred_fallthru
          _
        // Predicated region
        $region37: #{tpu_custom_call.1} parent=11 // pred_check
          %p268 = pneg %p192
        $region38: #{tpu_custom_call.1} parent=11 // pred_check_branch
          %270 = sbr.rel (%p268) target = $region40
        $region39: #{tpu_custom_call.1} parent=11 // pred_region
          _
        $region40: #{tpu_custom_call.1} parent=11 // pred_fallthru
          _
      $region12: #{tpu_custom_call.1} parent=5 // pred_fallthru
        _
      %p271 = scmp.lt.s32.totalorder %s19, 2
      // Predicated region
      $region41: #{tpu_custom_call.1} parent=5 // pred_check
        %p272 = pneg %p271
      $region42: #{tpu_custom_call.1} parent=5 // pred_check_branch
        %274 = sbr.rel (%p272) target = $region44
      $region43: #{tpu_custom_call.1} parent=5 // pred_region
        // Predicated region
        $region45: #{tpu_custom_call.1} parent=43 // pred_check
          %p275 = pneg %p39
        $region46: #{tpu_custom_call.1} parent=43 // pred_check_branch
          %277 = sbr.rel (%p275) target = $region48
        $region47: #{tpu_custom_call.1} parent=43 // pred_region
          %s278 = sand.u32 %s29, 1
          %s279 = scalar_lea.sflag [#allocation7], %s278
          %s280 = sand.u32 %s29, 1
          %s281 = smul.addr %s280, 4
          %s282 = scalar_lea.vmem [#allocation6], %s281
          %s283 = smul.u32 4, %s19
          %285 = vsyncadd %s279, 0
          %s286 = scalar_lea.hbm %s0, %s283
          %s287 = sshll.u32 %s286, 4
          %s288 = int_to_ptr.hbm [resolvable:$true] %s287
          %s289 = sshll.u32 %s282, 4
          %s290 = int_to_ptr.vmem [resolvable:$true] %s289
          %295 = dma.hbm_to_vmem [thread:$0]  %s288, 64, %s290, %s279, 16, 16, 1
        $region48: #{tpu_custom_call.1} parent=43 // pred_fallthru
          _
      $region44: #{tpu_custom_call.1} parent=5 // pred_fallthru
        _
      %p296 = scmp.le.s32.totalorder 1, %s19
      %p297 = scmp.lt.s32.totalorder %s19, 3
      %p298 = pnand %p296, %p297
      %p299 = pneg %p298
      // Predicated region
      $region49: #{tpu_custom_call.1} parent=5 // pred_check
        _
      $region50: #{tpu_custom_call.1} parent=5 // pred_check_branch
        %301 = sbr.rel (%p298) target = $region52
      $region51: #{tpu_custom_call.1} parent=5 // pred_region
        %s302 = ssub.s32 %s19, 1
        %s303 = sand.u32 %s32, 1
        %s304 = scalar_lea.sflag [#allocation7], %s303
        %s305 = sand.u32 %s32, 1
        %s306 = smul.addr %s305, 4
        %s307 = scalar_lea.vmem [#allocation6], %s306
        // Predicated region
        $region53: #{tpu_custom_call.1} parent=51 // pred_check
          %p308 = pneg %p45
        $region54: #{tpu_custom_call.1} parent=51 // pred_check_branch
          %310 = sbr.rel (%p308) target = $region56
        $region55: #{tpu_custom_call.1} parent=51 // pred_region
          %312 = dma.done %s304, 64
        $region56: #{tpu_custom_call.1} parent=51 // pred_fallthru
          _
        // Predicated region
        $region57: #{tpu_custom_call.1} parent=51 // pred_check
          %p313 = pneg %p66
        $region58: #{tpu_custom_call.1} parent=51 // pred_check_branch
          %315 = sbr.rel (%p313) target = $region60
        $region59: #{tpu_custom_call.1} parent=51 // pred_region
          %317 = dma.done [#allocation10], 128
        $region60: #{tpu_custom_call.1} parent=51 // pred_fallthru
          _
        // Predicated region
        $region61: #{tpu_custom_call.1} parent=51 // pred_check
          %p318 = pneg %p129
        $region62: #{tpu_custom_call.1} parent=51 // pred_check_branch
          %320 = sbr.rel (%p318) target = $region64
        $region63: #{tpu_custom_call.1} parent=51 // pred_region
          %322 = dma.done [#allocation10], 512
        $region64: #{tpu_custom_call.1} parent=51 // pred_fallthru
          _
        %s323 = sand.u32 %s32, 1
        %s324 = scalar_lea.sflag [#allocation7], %s323
        %s325 = sand.u32 %s32, 1
        %s326 = smul.addr %s325, 4
        %s327 = scalar_lea.vmem [#allocation6], %s326
        %p328 = pneg %p45
        %p329 = pneg %p42
        %p330 = pneg %p66
        %p331 = pneg %p63
        %p332 = pneg %p87
        %p333 = pneg %p84
        %p334 = pneg %p108
        %p335 = pneg %p105
        %p336 = pneg %p129
        %p337 = pneg %p126
        %p338 = pneg %p150
        %p339 = pneg %p147
        %p340 = pneg %p171
        %p341 = pneg %p168
        %p342 = pneg %p192
        %p343 = pneg %p189
        %p344 = pneg %p213
        %p345 = pneg %p210
        %s346 = smul.u32 4, %s24
        %p348 = scmp.eq.s32.totalorder %s24, 0
        // Predicated region
        $region65: #{tpu_custom_call.1} parent=51 // pred_check
          %p349 = pneg %p348
        $region66: #{tpu_custom_call.1} parent=51 // pred_check_branch
          %351 = sbr.rel (%p349) target = $region68
        $region67: #{tpu_custom_call.1} parent=51 // pred_region
          %vm352 = vcmask 254976
          %353 = vst.msk [vmem:[#allocation2] sm:$0x3] %vm352, 0.0
          %354 = vst.msk [vmem:[#allocation3] sm:$0x3] %vm352, 0.0
          %355 = vst.msk [vmem:[#allocation4] sm:$0x3] %vm352, 0.0
          %356 = vst.msk [vmem:[#allocation5] sm:$0x3] %vm352, 0.0
        $region68: #{tpu_custom_call.1} parent=51 // pred_fallthru
          _
        %v357 = vld [vmem:[%s307] sm:$0x1]
        %v358 = vld [vmem:[%s307 + $0x1] sm:$0x1]
        %v359 = vld [vmem:[%s307 + $0x2] sm:$0x1]
        %v360 = vld [vmem:[%s307 + $0x3] sm:$0x1]
        %v361 = vld [vmem:[#allocation9] sm:$0xf]
        %v362 = vld [vmem:[#allocation9 + $0x4] sm:$0xf]
        %364 = vst [vmem:[#allocation1] ss:$9 sm:$0xff] %v357
        %s366 = scalar_lea.vmem [#allocation1], 1
        %367 = vst [vmem:[%s366] ss:$9 sm:$0xff] %v358
        %s369 = scalar_lea.vmem [#allocation1], 2
        %370 = vst [vmem:[%s369] ss:$9 sm:$0xff] %v359
        %s372 = scalar_lea.vmem [#allocation1], 3
        %373 = vst [vmem:[%s372] ss:$9 sm:$0xff] %v360
        %v374 = vld [vmem:[#allocation1] sm:$0xff]
        %v377 = vunpack.c.l.b16 %v361
        %v378 = vunpack.c.l.b16 %v362
        %v379 = vpack.c.b16 %v378, %v377
        %vm381 = vcmask 130048
        %v382 = vsel %vm381, %v374, 0
        %384 = vmatpush.bf16.msra.mxu0 0
        %385 = vmatpush.bf16.msra.mxu0 0
        %386 = vmatpush.bf16.msra.mxu0 0
        %387 = vmatpush.bf16.msra.mxu0 0
        %388 = vmatpush.bf16.msra.mxu0 0
        %389 = vmatpush.bf16.msra.mxu0 0
        %390 = vmatpush.bf16.msra.mxu0 0
        %391 = vmatpush.bf16.msra.mxu0 %v379
        %392 = vmatmul.bf16.gmra.mxu0 %v382
        %v393 = vpop.f32.mrf.mxu0
        %v394 = vadd.f32 0.0, %v393
        %v395 = vpop.f32.mrf.mxu0
        %396 = vdwg.mxu0
        %v398 = vrot.slane %v394, 2
        %v399 = vrot.slane %v394, 4
        %v400 = vrot.slane %v394, 6
        %v404 = vld [vmem:[%s3] sm:$0x1]
        %v406 = vperm.slane %v404, 0
        %v408 = vadd.f32 %v394, %v406
        %v409 = vadd.f32 %v398, %v406
        %v410 = vadd.f32 %v399, %v406
        %v411 = vadd.f32 %v400, %v406
        %v412 = vld [vmem:[%s2] sm:$0xf]
        %v413 = vld [vmem:[%s2 + $0x4] sm:$0xf]
        %v414 = vld [vmem:[%s2 + $0x8] sm:$0xf]
        %v415 = vld [vmem:[%s2 + $0xc] sm:$0xf]
        %v416 = vld [vmem:[#allocation11] sm:$0xf]
        %v417 = vld [vmem:[#allocation11 + $0x4] sm:$0xf]
        %v418 = vld [vmem:[#allocation11 + $0x8] sm:$0xf]
        %v419 = vld [vmem:[#allocation11 + $0xc] sm:$0xf]
        %v420 = vld [vmem:[#allocation11 + $0x10] sm:$0xf]
        %v421 = vld [vmem:[#allocation11 + $0x14] sm:$0xf]
        %v422 = vld [vmem:[#allocation11 + $0x18] sm:$0xf]
        %v423 = vld [vmem:[#allocation11 + $0x1c] sm:$0xf]
        %v424 = vld [vmem:[%s5] sm:$0x1]
        %v426 = vperm.slane %v424, 0
        %v428 = vld [vmem:[#allocation2] sm:$0x3]
        %v429 = vld [vmem:[#allocation3] sm:$0x3]
        %v430 = vld [vmem:[#allocation4] sm:$0x3]
        %v431 = vld [vmem:[#allocation5] sm:$0x3]
        %v432 = vpack.c.bf16 %v428, %v428
        %v437 = vunpack.c.l.b16 %v412
        %v438 = vunpack.c.l.b16 %v413
        %v439 = vunpack.c.l.b16 %v414
        %v440 = vunpack.c.l.b16 %v415
        %v441 = vpack.c.b16 %v438, %v437
        %v442 = vpack.c.b16 %v440, %v439
        %vm445 = vcmask 261120
        %v447 = vsel %vm445, %v432, 0
        %449 = vmatpush.bf16.msra.mxu0 0
        %450 = vmatpush.bf16.msra.mxu0 0
        %451 = vmatpush.bf16.msra.mxu0 0
        %452 = vmatpush.bf16.msra.mxu0 0
        %453 = vmatpush.bf16.msra.mxu0 0
        %454 = vmatpush.bf16.msra.mxu0 0
        %455 = vmatpush.bf16.msra.mxu0 %v442
        %456 = vmatpush.bf16.msra.mxu0 %v441
        %457 = vmatmul.bf16.gmra.mxu0 %v447
        %v458 = vpop.f32.mrf.mxu0
        %v459 = vadd.f32 0.0, %v458
        %v460 = vpop.f32.mrf.mxu0
        %461 = vdwg.mxu0
        %v462 = vadd.f32 %v408, %v459
        %v463 = vxor.u32 %v462, 2147483648
        %v464 = vmul.f32 %v463, 1.442695
        %v465 = vpow.pop %v464
        %v466 = vadd.f32 %v465, 1.0
        %v467 = vrcp.pop %v466
        %v468 = vmul.f32 %v466, %v467
        %v469 = vsub.f32 1.0, %v468
        %v470 = vmul.f32 %v467, %v469
        %v471 = vadd.f32 %v467, %v470
        %vm472 = vweird.f32 %v466
        %vm473 = vweird.f32 %v467
        %vm474 = vmor %vm472, %vm473
        %v475 = vsel %vm474, %v467, %v471
        %v476 = vand.u32 2147483647, %v466
        %vm477 = vcmp.eq.f32.partialorder %v476, 8.507059e+37
        %v478 = vand.u32 %v466, 2147483648
        %v479 = vor.u32 1.1754944e-38, %v478
        %v480 = vsel %vm477, %v479, %v475
        %v481 = vmul.f32 1.0, %v480
        %v482 = vtanh.pop %v462
        %484 = vrot.lane.b32.xlu0 %v429, 32
        %v485 = vpop.permute.xlu0 %484
        %v487 = vmul.f32 %v481, %v485
        %489 = vrot.lane.b32.xlu0 %v482, 64
        %v490 = vpop.permute.xlu0 %489
        %v492 = vmul.f32 %v481, %v490
        %494 = vrot.lane.b32.xlu0 %v492, 32
        %v495 = vpop.permute.xlu0 %494
        %v497 = vadd.f32 %v487, %v495
        %v498 = vtanh.pop %v497
        %500 = vrot.lane.b32.xlu0 %v498, 64
        %v501 = vpop.permute.xlu0 %500
        %v503 = vmul.f32 %v481, %v501
        %505 = vst [vmem:[#allocation1] ss:$4 sm:$0xff] %v503
        %v506 = vld.sshfl [vmem:[#allocation1] sm:$0xff pattern:$0x73625140]
        %507 = vrot.lane.b32.xlu0 %v506, 32
        %v508 = vpop.permute.xlu0 %507
        %511 = vrot.lane.b32.xlu0 %v430, 32
        %v512 = vpop.permute.xlu0 %511
        %v514 = vsel %vm445, %v508, %v512
        %v515 = vpack.c.bf16 %v514, %v514
        %v524 = vunpack.c.l.b16 %v416
        %v525 = vunpack.c.l.b16 %v417
        %v526 = vunpack.c.l.b16 %v418
        %v527 = vunpack.c.l.b16 %v419
        %v528 = vunpack.c.l.b16 %v420
        %v529 = vunpack.c.l.b16 %v421
        %v530 = vunpack.c.l.b16 %v422
        %v531 = vunpack.c.l.b16 %v423
        %v532 = vpack.c.b16 %v525, %v524
        %v533 = vpack.c.b16 %v527, %v526
        %v534 = vpack.c.b16 %v529, %v528
        %v535 = vpack.c.b16 %v531, %v530
        %vm540 = vcmask 523264
        %v542 = vsel %vm540, %v515, 0
        %544 = vmatpush.bf16.msra.mxu0 0
        %545 = vmatpush.bf16.msra.mxu0 0
        %546 = vmatpush.bf16.msra.mxu0 0
        %547 = vmatpush.bf16.msra.mxu0 0
        %548 = vmatpush.bf16.msra.mxu0 %v535
        %549 = vmatpush.bf16.msra.mxu0 %v534
        %550 = vmatpush.bf16.msra.mxu0 %v533
        %551 = vmatpush.bf16.msra.mxu0 %v532
        %552 = vmatmul.bf16.gmra.mxu0 %v542
        %v553 = vpop.f32.mrf.mxu0
        %v554 = vadd.f32 %v426, %v553
        %v555 = vpop.f32.mrf.mxu0
        %556 = vdwg.mxu0
        %v557 = vxor.u32 %v554, 2147483648
        %v558 = vmul.f32 %v557, 1.442695
        %v559 = vpow.pop %v558
        %v560 = vadd.f32 %v559, 1.0
        %v561 = vrcp.pop %v560
        %v562 = vmul.f32 %v560, %v561
        %v563 = vsub.f32 1.0, %v562
        %v564 = vmul.f32 %v561, %v563
        %v565 = vadd.f32 %v561, %v564
        %vm566 = vweird.f32 %v560
        %vm567 = vweird.f32 %v561
        %vm568 = vmor %vm566, %vm567
        %v569 = vsel %vm568, %v561, %v565
        %v570 = vand.u32 2147483647, %v560
        %vm571 = vcmp.eq.f32.partialorder %v570, 8.507059e+37
        %v572 = vand.u32 %v560, 2147483648
        %v573 = vor.u32 1.1754944e-38, %v572
        %v574 = vsel %vm571, %v573, %v569
        %v575 = vmul.f32 1.0, %v574
        %v576 = vtanh.pop %v554
        %578 = vrot.lane.b32.xlu0 %v431, 32
        %v579 = vpop.permute.xlu0 %578
        %v581 = vmul.f32 %v575, %v579
        %583 = vrot.lane.b32.xlu0 %v576, 64
        %v584 = vpop.permute.xlu0 %583
        %v586 = vmul.f32 %v575, %v584
        %588 = vrot.lane.b32.xlu0 %v586, 32
        %v589 = vpop.permute.xlu0 %588
        %v591 = vadd.f32 %v581, %v589
        %v592 = vtanh.pop %v591
        %594 = vrot.lane.b32.xlu0 %v592, 64
        %v595 = vpop.permute.xlu0 %594
        %v597 = vmul.f32 %v575, %v595
        %v598 = vpack.c.bf16 %v503, %v503
        %600 = vrot.lane.b32.xlu0 %v598, 32
        %v601 = vpop.permute.xlu0 %600
        %v603 = vsel %vm445, %v601, 0
        %605 = vmatpush.bf16.msra.mxu0 0
        %606 = vmatpush.bf16.msra.mxu0 0
        %607 = vmatpush.bf16.msra.mxu0 0
        %608 = vmatpush.bf16.msra.mxu0 0
        %609 = vmatpush.bf16.msra.mxu0 0
        %610 = vmatpush.bf16.msra.mxu0 0
        %611 = vmatpush.bf16.msra.mxu0 %v442
        %612 = vmatpush.bf16.msra.mxu0 %v441
        %613 = vmatmul.bf16.gmra.mxu0 %v603
        %v614 = vpop.f32.mrf.mxu0
        %v615 = vadd.f32 0.0, %v614
        %v616 = vpop.f32.mrf.mxu0
        %617 = vdwg.mxu0
        %v618 = vadd.f32 %v409, %v615
        %v619 = vxor.u32 %v618, 2147483648
        %v620 = vmul.f32 %v619, 1.442695
        %v621 = vpow.pop %v620
        %v622 = vadd.f32 %v621, 1.0
        %v623 = vrcp.pop %v622
        %v624 = vmul.f32 %v622, %v623
        %v625 = vsub.f32 1.0, %v624
        %v626 = vmul.f32 %v623, %v625
        %v627 = vadd.f32 %v623, %v626
        %vm628 = vweird.f32 %v622
        %vm629 = vweird.f32 %v623
        %vm630 = vmor %vm628, %vm629
        %v631 = vsel %vm630, %v623, %v627
        %v632 = vand.u32 2147483647, %v622
        %vm633 = vcmp.eq.f32.partialorder %v632, 8.507059e+37
        %v634 = vand.u32 %v622, 2147483648
        %v635 = vor.u32 1.1754944e-38, %v634
        %v636 = vsel %vm633, %v635, %v631
        %v637 = vmul.f32 1.0, %v636
        %v638 = vtanh.pop %v618
        %v639 = vmul.f32 %v637, %v497
        %641 = vrot.lane.b32.xlu0 %v638, 64
        %v642 = vpop.permute.xlu0 %641
        %v644 = vmul.f32 %v637, %v642
        %646 = vrot.lane.b32.xlu0 %v644, 32
        %v647 = vpop.permute.xlu0 %646
        %v649 = vadd.f32 %v639, %v647
        %v650 = vtanh.pop %v649
        %652 = vrot.lane.b32.xlu0 %v650, 64
        %v653 = vpop.permute.xlu0 %652
        %v655 = vmul.f32 %v637, %v653
        %657 = vst [vmem:[#allocation1] ss:$4 sm:$0xff] %v655
        %v658 = vld.sshfl [vmem:[#allocation1] sm:$0xff pattern:$0x73625140]
        %659 = vrot.lane.b32.xlu0 %v658, 32
        %v660 = vpop.permute.xlu0 %659
        %663 = vrot.lane.b32.xlu0 %v597, 64
        %v664 = vpop.permute.xlu0 %663
        %v666 = vsel %vm445, %v660, %v664
        %v667 = vpack.c.bf16 %v666, %v666
        %v669 = vsel %vm540, %v667, 0
        %671 = vmatpush.bf16.msra.mxu0 0
        %672 = vmatpush.bf16.msra.mxu0 0
        %673 = vmatpush.bf16.msra.mxu0 0
        %674 = vmatpush.bf16.msra.mxu0 0
        %675 = vmatpush.bf16.msra.mxu0 %v535
        %676 = vmatpush.bf16.msra.mxu0 %v534
        %677 = vmatpush.bf16.msra.mxu0 %v533
        %678 = vmatpush.bf16.msra.mxu0 %v532
        %679 = vmatmul.bf16.gmra.mxu0 %v669
        %v680 = vpop.f32.mrf.mxu0
        %v681 = vadd.f32 %v426, %v680
        %v682 = vpop.f32.mrf.mxu0
        %683 = vdwg.mxu0
        %v684 = vxor.u32 %v681, 2147483648
        %v685 = vmul.f32 %v684, 1.442695
        %v686 = vpow.pop %v685
        %v687 = vadd.f32 %v686, 1.0
        %v688 = vrcp.pop %v687
        %v689 = vmul.f32 %v687, %v688
        %v690 = vsub.f32 1.0, %v689
        %v691 = vmul.f32 %v688, %v690
        %v692 = vadd.f32 %v688, %v691
        %vm693 = vweird.f32 %v687
        %vm694 = vweird.f32 %v688
        %vm695 = vmor %vm693, %vm694
        %v696 = vsel %vm695, %v688, %v692
        %v697 = vand.u32 2147483647, %v687
        %vm698 = vcmp.eq.f32.partialorder %v697, 8.507059e+37
        %v699 = vand.u32 %v687, 2147483648
        %v700 = vor.u32 1.1754944e-38, %v699
        %v701 = vsel %vm698, %v700, %v696
        %v702 = vmul.f32 1.0, %v701
        %v703 = vtanh.pop %v681
        %v704 = vmul.f32 %v702, %v591
        %706 = vrot.lane.b32.xlu0 %v703, 64
        %v707 = vpop.permute.xlu0 %706
        %v709 = vmul.f32 %v702, %v707
        %711 = vrot.lane.b32.xlu0 %v709, 32
        %v712 = vpop.permute.xlu0 %711
        %v714 = vadd.f32 %v704, %v712
        %v715 = vtanh.pop %v714
        %717 = vrot.lane.b32.xlu0 %v715, 64
        %v718 = vpop.permute.xlu0 %717
        %v720 = vmul.f32 %v702, %v718
        %v721 = vpack.c.bf16 %v655, %v655
        %723 = vrot.lane.b32.xlu0 %v721, 32
        %v724 = vpop.permute.xlu0 %723
        %v726 = vsel %vm445, %v724, 0
        %728 = vmatpush.bf16.msra.mxu0 0
        %729 = vmatpush.bf16.msra.mxu0 0
        %730 = vmatpush.bf16.msra.mxu0 0
        %731 = vmatpush.bf16.msra.mxu0 0
        %732 = vmatpush.bf16.msra.mxu0 0
        %733 = vmatpush.bf16.msra.mxu0 0
        %734 = vmatpush.bf16.msra.mxu0 %v442
        %735 = vmatpush.bf16.msra.mxu0 %v441
        %736 = vmatmul.bf16.gmra.mxu0 %v726
        %v737 = vpop.f32.mrf.mxu0
        %v738 = vadd.f32 0.0, %v737
        %v739 = vpop.f32.mrf.mxu0
        %740 = vdwg.mxu0
        %v741 = vadd.f32 %v410, %v738
        %v742 = vxor.u32 %v741, 2147483648
        %v743 = vmul.f32 %v742, 1.442695
        %v744 = vpow.pop %v743
        %v745 = vadd.f32 %v744, 1.0
        %v746 = vrcp.pop %v745
        %v747 = vmul.f32 %v745, %v746
        %v748 = vsub.f32 1.0, %v747
        %v749 = vmul.f32 %v746, %v748
        %v750 = vadd.f32 %v746, %v749
        %vm751 = vweird.f32 %v745
        %vm752 = vweird.f32 %v746
        %vm753 = vmor %vm751, %vm752
        %v754 = vsel %vm753, %v746, %v750
        %v755 = vand.u32 2147483647, %v745
        %vm756 = vcmp.eq.f32.partialorder %v755, 8.507059e+37
        %v757 = vand.u32 %v745, 2147483648
        %v758 = vor.u32 1.1754944e-38, %v757
        %v759 = vsel %vm756, %v758, %v754
        %v760 = vmul.f32 1.0, %v759
        %v761 = vtanh.pop %v741
        %v762 = vmul.f32 %v760, %v649
        %764 = vrot.lane.b32.xlu0 %v761, 64
        %v765 = vpop.permute.xlu0 %764
        %v767 = vmul.f32 %v760, %v765
        %769 = vrot.lane.b32.xlu0 %v767, 32
        %v770 = vpop.permute.xlu0 %769
        %v772 = vadd.f32 %v762, %v770
        %v773 = vtanh.pop %v772
        %775 = vrot.lane.b32.xlu0 %v773, 64
        %v776 = vpop.permute.xlu0 %775
        %v778 = vmul.f32 %v760, %v776
        %780 = vst [vmem:[#allocation1] ss:$4 sm:$0xff] %v778
        %v781 = vld.sshfl [vmem:[#allocation1] sm:$0xff pattern:$0x73625140]
        %782 = vrot.lane.b32.xlu0 %v781, 32
        %v783 = vpop.permute.xlu0 %782
        %786 = vrot.lane.b32.xlu0 %v720, 64
        %v787 = vpop.permute.xlu0 %786
        %v789 = vsel %vm445, %v783, %v787
        %v790 = vpack.c.bf16 %v789, %v789
        %v792 = vsel %vm540, %v790, 0
        %794 = vmatpush.bf16.msra.mxu0 0
        %795 = vmatpush.bf16.msra.mxu0 0
        %796 = vmatpush.bf16.msra.mxu0 0
        %797 = vmatpush.bf16.msra.mxu0 0
        %798 = vmatpush.bf16.msra.mxu0 %v535
        %799 = vmatpush.bf16.msra.mxu0 %v534
        %800 = vmatpush.bf16.msra.mxu0 %v533
        %801 = vmatpush.bf16.msra.mxu0 %v532
        %802 = vmatmul.bf16.gmra.mxu0 %v792
        %v803 = vpop.f32.mrf.mxu0
        %v804 = vadd.f32 %v426, %v803
        %v805 = vpop.f32.mrf.mxu0
        %806 = vdwg.mxu0
        %v807 = vxor.u32 %v804, 2147483648
        %v808 = vmul.f32 %v807, 1.442695
        %v809 = vpow.pop %v808
        %v810 = vadd.f32 %v809, 1.0
        %v811 = vrcp.pop %v810
        %v812 = vmul.f32 %v810, %v811
        %v813 = vsub.f32 1.0, %v812
        %v814 = vmul.f32 %v811, %v813
        %v815 = vadd.f32 %v811, %v814
        %vm816 = vweird.f32 %v810
        %vm817 = vweird.f32 %v811
        %vm818 = vmor %vm816, %vm817
        %v819 = vsel %vm818, %v811, %v815
        %v820 = vand.u32 2147483647, %v810
        %vm821 = vcmp.eq.f32.partialorder %v820, 8.507059e+37
        %v822 = vand.u32 %v810, 2147483648
        %v823 = vor.u32 1.1754944e-38, %v822
        %v824 = vsel %vm821, %v823, %v819
        %v825 = vmul.f32 1.0, %v824
        %v826 = vtanh.pop %v804
        %v827 = vmul.f32 %v825, %v714
        %829 = vrot.lane.b32.xlu0 %v826, 64
        %v830 = vpop.permute.xlu0 %829
        %v832 = vmul.f32 %v825, %v830
        %834 = vrot.lane.b32.xlu0 %v832, 32
        %v835 = vpop.permute.xlu0 %834
        %v837 = vadd.f32 %v827, %v835
        %v838 = vtanh.pop %v837
        %840 = vrot.lane.b32.xlu0 %v838, 64
        %v841 = vpop.permute.xlu0 %840
        %v843 = vmul.f32 %v825, %v841
        %v844 = vpack.c.bf16 %v778, %v778
        %846 = vrot.lane.b32.xlu0 %v844, 32
        %v847 = vpop.permute.xlu0 %846
        %v849 = vsel %vm445, %v847, 0
        %851 = vmatpush.bf16.msra.mxu0 0
        %852 = vmatpush.bf16.msra.mxu0 0
        %853 = vmatpush.bf16.msra.mxu0 0
        %854 = vmatpush.bf16.msra.mxu0 0
        %855 = vmatpush.bf16.msra.mxu0 0
        %856 = vmatpush.bf16.msra.mxu0 0
        %857 = vmatpush.bf16.msra.mxu0 %v442
        %858 = vmatpush.bf16.msra.mxu0 %v441
        %859 = vmatmul.bf16.gmra.mxu0 %v849
        %v860 = vpop.f32.mrf.mxu0
        %v861 = vadd.f32 0.0, %v860
        %v862 = vpop.f32.mrf.mxu0
        %863 = vdwg.mxu0
        %v864 = vadd.f32 %v411, %v861
        %v865 = vxor.u32 %v864, 2147483648
        %v866 = vmul.f32 %v865, 1.442695
        %v867 = vpow.pop %v866
        %v868 = vadd.f32 %v867, 1.0
        %v869 = vrcp.pop %v868
        %v870 = vmul.f32 %v868, %v869
        %v871 = vsub.f32 1.0, %v870
        %v872 = vmul.f32 %v869, %v871
        %v873 = vadd.f32 %v869, %v872
        %vm874 = vweird.f32 %v868
        %vm875 = vweird.f32 %v869
        %vm876 = vmor %vm874, %vm875
        %v877 = vsel %vm876, %v869, %v873
        %v878 = vand.u32 2147483647, %v868
        %vm879 = vcmp.eq.f32.partialorder %v878, 8.507059e+37
        %v880 = vand.u32 %v868, 2147483648
        %v881 = vor.u32 1.1754944e-38, %v880
        %v882 = vsel %vm879, %v881, %v877
        %v883 = vmul.f32 1.0, %v882
        %v884 = vtanh.pop %v864
        %v885 = vmul.f32 %v883, %v772
        %887 = vrot.lane.b32.xlu0 %v884, 64
        %v888 = vpop.permute.xlu0 %887
        %v890 = vmul.f32 %v883, %v888
        %892 = vrot.lane.b32.xlu0 %v890, 32
        %v893 = vpop.permute.xlu0 %892
        %v895 = vadd.f32 %v885, %v893
        %v896 = vtanh.pop %v895
        %898 = vrot.lane.b32.xlu0 %v896, 64
        %v899 = vpop.permute.xlu0 %898
        %v901 = vmul.f32 %v883, %v899
        %903 = vst [vmem:[#allocation1] ss:$4 sm:$0xff] %v901
        %v904 = vld.sshfl [vmem:[#allocation1] sm:$0xff pattern:$0x73625140]
        %905 = vrot.lane.b32.xlu0 %v904, 32
        %v906 = vpop.permute.xlu0 %905
        %909 = vrot.lane.b32.xlu0 %v843, 64
        %v910 = vpop.permute.xlu0 %909
        %v912 = vsel %vm445, %v906, %v910
        %v913 = vpack.c.bf16 %v912, %v912
        %v915 = vsel %vm540, %v913, 0
        %917 = vmatpush.bf16.msra.mxu0 0
        %918 = vmatpush.bf16.msra.mxu0 0
        %919 = vmatpush.bf16.msra.mxu0 0
        %920 = vmatpush.bf16.msra.mxu0 0
        %921 = vmatpush.bf16.msra.mxu0 %v535
        %922 = vmatpush.bf16.msra.mxu0 %v534
        %923 = vmatpush.bf16.msra.mxu0 %v533
        %924 = vmatpush.bf16.msra.mxu0 %v532
        %925 = vmatmul.bf16.gmra.mxu0 %v915
        %v926 = vpop.f32.mrf.mxu0
        %v927 = vadd.f32 %v426, %v926
        %v928 = vpop.f32.mrf.mxu0
        %929 = vdwg.mxu0
        %v930 = vxor.u32 %v927, 2147483648
        %v931 = vmul.f32 %v930, 1.442695
        %v932 = vpow.pop %v931
        %v933 = vadd.f32 %v932, 1.0
        %v934 = vrcp.pop %v933
        %v935 = vmul.f32 %v933, %v934
        %v936 = vsub.f32 1.0, %v935
        %v937 = vmul.f32 %v934, %v936
        %v938 = vadd.f32 %v934, %v937
        %vm939 = vweird.f32 %v933
        %vm940 = vweird.f32 %v934
        %vm941 = vmor %vm939, %vm940
        %v942 = vsel %vm941, %v934, %v938
        %v943 = vand.u32 2147483647, %v933
        %vm944 = vcmp.eq.f32.partialorder %v943, 8.507059e+37
        %v945 = vand.u32 %v933, 2147483648
        %v946 = vor.u32 1.1754944e-38, %v945
        %v947 = vsel %vm944, %v946, %v942
        %v948 = vmul.f32 1.0, %v947
        %v949 = vtanh.pop %v927
        %v950 = vmul.f32 %v948, %v837
        %952 = vrot.lane.b32.xlu0 %v949, 64
        %v953 = vpop.permute.xlu0 %952
        %v955 = vmul.f32 %v948, %v953
        %957 = vrot.lane.b32.xlu0 %v955, 32
        %v958 = vpop.permute.xlu0 %957
        %v960 = vadd.f32 %v950, %v958
        %v961 = vtanh.pop %v960
        %963 = vrot.lane.b32.xlu0 %v961, 64
        %v964 = vpop.permute.xlu0 %963
        %v966 = vmul.f32 %v948, %v964
        %967 = vst [vmem:[#allocation1] ss:$4 sm:$0xff] %v901
        %v968 = vld.sshfl [vmem:[#allocation1] sm:$0xff pattern:$0x73625140]
        %969 = vrot.lane.b32.xlu0 %v968, 32
        %v970 = vpop.permute.xlu0 %969
        %vm972 = vcmask 254976
        %973 = vst.msk [vmem:[#allocation2] sm:$0x3] %vm972, %v970
        %975 = vst [vmem:[#allocation1] ss:$4 sm:$0xff] %v895
        %v976 = vld.sshfl [vmem:[#allocation1] sm:$0xff pattern:$0x73625140]
        %977 = vrot.lane.b32.xlu0 %v976, 96
        %v978 = vpop.permute.xlu0 %977
        %980 = vst.msk [vmem:[#allocation3] sm:$0x3] %vm972, %v978
        %982 = vrot.lane.b32.xlu0 %v966, 32
        %v983 = vpop.permute.xlu0 %982
        %985 = vst.msk [vmem:[#allocation4] sm:$0x3] %vm972, %v983
        %987 = vrot.lane.b32.xlu0 %v960, 96
        %v988 = vpop.permute.xlu0 %987
        %990 = vst.msk [vmem:[#allocation5] sm:$0x3] %vm972, %v988
        %p991 = scmp.eq.s32.totalorder %s24, 1
        // Predicated region
        $region69: #{tpu_custom_call.1} parent=51 // pred_check
          %p992 = pneg %p991
        $region70: #{tpu_custom_call.1} parent=51 // pred_check_branch
          %994 = sbr.rel (%p992) target = $region72
        $region71: #{tpu_custom_call.1} parent=51 // pred_region
          %v995 = vpack.c.bf16 %v966, %v966
          %v996 = vld [vmem:[%s6] sm:$0xf]
          %v997 = vld [vmem:[%s6 + $0x4] sm:$0xf]
          %v998 = vld [vmem:[%s6 + $0x8] sm:$0xf]
          %v999 = vld [vmem:[%s6 + $0xc] sm:$0xf]
          %v1000 = vld [vmem:[%s7] sm:$0x1]
          %v1002 = vperm.slane %v1000, 0
          %1005 = vrot.lane.b32.xlu0 %v995, 32
          %v1006 = vpop.permute.xlu0 %1005
          %v1011 = vunpack.c.l.b16 %v996
          %v1012 = vunpack.c.l.b16 %v997
          %v1013 = vunpack.c.l.b16 %v998
          %v1014 = vunpack.c.l.b16 %v999
          %v1015 = vpack.c.b16 %v1012, %v1011
          %v1016 = vpack.c.b16 %v1014, %v1013
          %v1020 = vsel %vm445, %v1006, 0
          %1022 = vmatpush.bf16.msra.mxu0 0
          %1023 = vmatpush.bf16.msra.mxu0 0
          %1024 = vmatpush.bf16.msra.mxu0 0
          %1025 = vmatpush.bf16.msra.mxu0 0
          %1026 = vmatpush.bf16.msra.mxu0 0
          %1027 = vmatpush.bf16.msra.mxu0 0
          %1028 = vmatpush.bf16.msra.mxu0 %v1016
          %1029 = vmatpush.bf16.msra.mxu0 %v1015
          %1030 = vmatmul.bf16.gmra.mxu0 %v1020
          %v1031 = vpop.f32.mrf.mxu0
          %v1032 = vadd.f32 %v1002, %v1031
          %v1033 = vpop.f32.mrf.mxu0
          %1034 = vdwg.mxu0
          %vm1035 = vcmask 33792
          %1036 = vst.msk [vmem:[#allocation12] sm:$0x3] %vm1035, %v1032
        $region72: #{tpu_custom_call.1} parent=51 // pred_fallthru
          _
        // Predicated region
        $region73: #{tpu_custom_call.1} parent=51 // pred_check
          %p1037 = pneg %p210
        $region74: #{tpu_custom_call.1} parent=51 // pred_check_branch
          %1039 = sbr.rel (%p1037) target = $region76
        $region75: #{tpu_custom_call.1} parent=51 // pred_region
          %1041 = vsyncadd [#allocation8], 0
          %s1043 = sshll.u32 [#allocation12], 4
          %s1044 = int_to_ptr.vmem [resolvable:$true] %s1043
          %s1045 = sshll.u32 %s8, 4
          %s1046 = int_to_ptr.hbm [resolvable:$true] %s1045
          %1048 = dma.vmem_to_hbm [thread:$0]  %s1044, 32, %s1046, [#allocation8]
        $region76: #{tpu_custom_call.1} parent=51 // pred_fallthru
          _
        // Predicated region
        $region77: #{tpu_custom_call.1} parent=51 // pred_check
          %p1049 = pneg %p210
        $region78: #{tpu_custom_call.1} parent=51 // pred_check_branch
          %1051 = sbr.rel (%p1049) target = $region80
        $region79: #{tpu_custom_call.1} parent=51 // pred_region
          %1053 = dma.done [#allocation8], 32
        $region80: #{tpu_custom_call.1} parent=51 // pred_fallthru
          _
      $region52: #{tpu_custom_call.1} parent=5 // pred_fallthru
        _
      %p1054 = scmp.le.s32.totalorder 2, %s19
      // Predicated region
      $region81: #{tpu_custom_call.1} parent=5 // pred_check
        %p1055 = pneg %p1054
      $region82: #{tpu_custom_call.1} parent=5 // pred_check_branch
        %1057 = sbr.rel (%p1055) target = $region84
      $region83: #{tpu_custom_call.1} parent=5 // pred_region
        %s1058 = ssub.s32 %s19, 2
      $region84: #{tpu_custom_call.1} parent=5 // pred_fallthru
        _
    $region6: #{tpu_custom_call.1} parent=1 // loop_footer
      %s23 = sadd.s32 1, %s19
    $region7: #{tpu_custom_call.1} parent=1 // loop_footer_branch
      %18 = sbr.rel target = $region3
    $region8: #{tpu_custom_call.1} parent=1 // loop_exit
      _
    %1059 = vsyncpa [#allocation7], 1
    %s1060 = scalar_lea.sflag [#allocation7], 1
    %1061 = vsyncpa %s1060, 1
    %1062 = vsyncpa [#allocation10], 1
    %1063 = vsyncpa [#allocation8], 1
    %s1064 = scalar_lea.sflag [#allocation8], 1
    %1065 = vsyncpa %s1064, 1

</llo_original>
